<compile_context>
chip_gen: v7x
topology: tpu7x:2x2x1
jax: 0.10.0
libtpu: 0.0.40
codegen_flags: <defaults>
</compile_context>

<pallas_src>
import functools
import numpy as np
import jax
import jax.numpy as jnp
from jax.experimental import pallas as pl
from jax.experimental.pallas import tpu as pltpu

EPS = 1e-5
ACT_DTYPE = jnp.bfloat16   # MXU operand / intermediate-activation dtype (accumulate f32)


# --------------------------------------------------------------------------- #
# Host-side helpers: BN folding and resampling matrices / grid constants
# --------------------------------------------------------------------------- #
def fold_bn(gamma, beta, mean, var, conv_bias=None):
    s = gamma / jnp.sqrt(var + EPS)
    b = beta - mean * s
    if conv_bias is not None:
        b = b + conv_bias * s
    return s, b


def _bilinear_1d(in_s, out_s):
    # PyTorch F.interpolate(mode='bilinear', align_corners=False) 1-D weights.
    i = np.arange(out_s, dtype=np.float64)
    src = (i + 0.5) * (in_s / out_s) - 0.5
    src = np.maximum(src, 0.0)
    x0 = np.minimum(np.floor(src).astype(np.int64), in_s - 1)
    x1 = np.minimum(x0 + 1, in_s - 1)
    lam = src - x0
    R = np.zeros((out_s, in_s), dtype=np.float32)
    R[np.arange(out_s), x0] += (1.0 - lam)
    R[np.arange(out_s), x1] += lam
    return R


def bilinear_matrix(in_h, in_w, out_h, out_w):
    # TODO(synk): production: separable row/column passes instead of this dense kron.
    return np.kron(_bilinear_1d(in_h, out_h), _bilinear_1d(in_w, out_w))


def _adaptive_pool_1d(in_s, out_s):
    R = np.zeros((out_s, in_s), dtype=np.float32)
    for i in range(out_s):
        s = (i * in_s) // out_s
        e = -((-(i + 1) * in_s) // out_s)
        R[i, s:e] = 1.0 / (e - s)
    return R


def adaptive_pool_matrix(in_h, in_w, out_h, out_w):
    return np.kron(_adaptive_pool_1d(in_h, out_h), _adaptive_pool_1d(in_w, out_w))


def make_grid_consts(Hl, Wl):
    """Flow-warp base grid (linspace coords) and per-tap 3x3 boundary masks (host numpy)."""
    hh, ww = np.meshgrid(np.arange(Hl), np.arange(Wl), indexing='ij')
    hh = hh.reshape(-1)
    ww = ww.reshape(-1)
    gx = np.linspace(-1.0, 1.0, Wl)[ww]
    gy = np.linspace(-1.0, 1.0, Hl)[hh]
    basegrid = np.stack([gx, gy], axis=-1).astype(np.float32)          # (HWl, 2)
    masks = np.zeros((9, Hl * Wl, 1), np.float32)
    t = 0
    for dy in (-1, 0, 1):
        for dx in (-1, 0, 1):
            ok = ((hh + dy >= 0) & (hh + dy < Hl) & (ww + dx >= 0) & (ww + dx < Wl))
            masks[t, :, 0] = ok.astype(np.float32)
            t += 1
    return basegrid, masks


def _vmem_limit(ins, out_shapes):
    tot = 0
    for a in list(ins) + list(out_shapes):
        tot += int(np.prod(a.shape)) * np.dtype(a.dtype).itemsize
    return int(min(64 << 20, max(16 << 20, 2 * tot + (8 << 20))))


def _const_spec(a):
    nd = a.ndim
    return pl.BlockSpec(a.shape, lambda b: (0,) * nd)


# --------------------------------------------------------------------------- #
# In-kernel helpers
# --------------------------------------------------------------------------- #
def _shift_rows(x, s):
    """y[p] = x[p + s] along the flattened-pixel axis, zero-filled (s is a static int)."""
    if s == 0:
        return x
    HW, C = x.shape
    z = jnp.zeros((abs(s), C), x.dtype)
    if s > 0:
        return jnp.concatenate([x[s:], z], axis=0)
    return jnp.concatenate([z, x[:HW + s]], axis=0)


def _conv3x3_taps(parts, w_ref, mask_ref, cout, Wl):
    """3x3 conv (padding=1) over channel-concat(parts) via 9 shifted-tap matmuls.

    parts: list of (HW, C_i) f32 arrays; w_ref: (9, sum C_i, cout) bf16 ref;
    mask_ref: (9, HW, 1) f32 boundary masks; returns (HW, cout) f32 accumulator.
    """
    HW = parts[0].shape[0]
    acc = jnp.zeros((HW, cout), jnp.float32)
    t = 0
    for dy in (-1, 0, 1):
        for dx in (-1, 0, 1):
            s = dy * Wl + dx
            m = mask_ref[t]                               # (HW, 1) f32 boundary mask
            wt = w_ref[t]                                 # (sumC, cout) bf16
            coff = 0
            for part in parts:
                C = part.shape[1]
                tap = (_shift_rows(part, s) * m).astype(ACT_DTYPE)
                acc = acc + jnp.dot(tap, wt[coff:coff + C, :],
                                    preferred_element_type=jnp.float32)
                coff += C
            t += 1
    return acc


# --------------------------------------------------------------------------- #
# Pallas kernels
# --------------------------------------------------------------------------- #
def _psp_kernel(x_ref, wall_ref, p_ref, u_ref, u0_ref, b_ref, o_ref, oup_ref,
                *, n_stages, fd):
    """Whole PSP module per batch.

    One merged (Cin, (n+1)*fd) matmul covers all stage 1x1 convs + the identity branch
    (stage BN + bottleneck conv/BN folded on the host); each stage is then adaptive-pooled,
    bilinearly upsampled and accumulated.  Also emits psp_out upsampled to fusion size.
    """
    x = x_ref[0]                                                         # (HW, Cin) bf16
    z = jnp.dot(x, wall_ref[...], preferred_element_type=jnp.float32)    # (HW, (n+1)*fd)
    acc = z[:, n_stages * fd:]                                           # identity branch
    zb = z[:, :n_stages * fd].astype(ACT_DTYPE)
    for s in range(n_stages):
        zs = zb[:, s * fd:(s + 1) * fd]                                  # (HW, fd) bf16
        pooled = jnp.dot(p_ref[s], zs, preferred_element_type=jnp.float32)   # (spad, fd)
        acc = acc + jnp.dot(u_ref[s], pooled.astype(ACT_DTYPE),
                            preferred_element_type=jnp.float32)          # (HW, fd)
    acc = jnp.maximum(acc + b_ref[...], 0.0)
    # TODO(synk): Dropout2d(0.1) is identity in eval mode; training-mode dropout not modeled.
    o_ref[0] = acc.astype(o_ref.dtype)
    # TODO(synk): production: separable row/column passes instead of the dense (HW0, HW) up0.
    oup_ref[0] = jnp.dot(u0_ref[...], acc.astype(ACT_DTYPE),
                         preferred_element_type=jnp.float32).astype(oup_ref.dtype)


def _level_kernel(x_ref, hf_ref, uhf_ref, win_ref, bin_ref, wdl_ref, wdh_ref,
                  wfl_ref, bg_ref, msk_ref, wout_ref, bout_ref, *rest,
                  Hl, Wl, Hh, Wh, has_up):
    """One full FPN level per batch: fpn_in + AlignModule + residual + fpn_out (+ fusion up)."""
    if has_up:
        ufus_ref, f_ref, fus_ref = rest
    else:
        f_ref, fus_ref = rest
    HWl, HWh = Hl * Wl, Hh * Wh

    x = x_ref[0]                                                         # (HWl, Cin) bf16
    hf = hf_ref[0]                                                       # (HWh, fd) bf16

    # fpn_in: 1x1 conv (+ folded BN) + ReLU
    conv_x = jnp.maximum(
        jnp.dot(x, win_ref[...], preferred_element_type=jnp.float32) + bin_ref[...], 0.0)
    conv_x_b = conv_x.astype(ACT_DTYPE)

    # AlignModule: down_l / down_h, bilinear upsample of down_h to (Hl, Wl)
    low_d = jnp.dot(conv_x_b, wdl_ref[...], preferred_element_type=jnp.float32)   # (HWl, C2)
    hf_d = jnp.dot(hf, wdh_ref[...], preferred_element_type=jnp.float32)          # (HWh, C2)
    # TODO(synk): production: separable row/column passes instead of dense (HWl, HWh) upsample.
    hf_up = jnp.dot(uhf_ref[...], hf_d.astype(ACT_DTYPE),
                    preferred_element_type=jnp.float32)                           # (HWl, C2)

    # flow_make: 3x3 conv over concat([hf_up, low_d]) — in-kernel im2col (shifted taps).
    # flow never leaves VMEM (no lane-2 stores / HBM round trip).
    flow = _conv3x3_taps([hf_up, low_d], wfl_ref, msk_ref, 2, Wl)                 # (HWl, 2) f32

    # flow_warp grid (F.grid_sample defaults: bilinear / zeros padding / align_corners=False)
    bg = bg_ref[...]
    gx = bg[:, 0:1] + flow[:, 0:1] * (1.0 / Wl)
    gy = bg[:, 1:2] + flow[:, 1:2] * (1.0 / Hl)
    ix = ((gx + 1.0) * Wh - 1.0) * 0.5
    iy = ((gy + 1.0) * Hh - 1.0) * 0.5
    x0 = jnp.floor(ix)
    y0 = jnp.floor(iy)
    corners = ((x0, y0, (x0 + 1.0 - ix) * (y0 + 1.0 - iy)),
               (x0 + 1.0, y0, (ix - x0) * (y0 + 1.0 - iy)),
               (x0, y0 + 1.0, (x0 + 1.0 - ix) * (iy - y0)),
               (x0 + 1.0, y0 + 1.0, (ix - x0) * (iy - y0)))

    # Bilinear gather as a lane-dense bf16 one-hot matrix fed to the MXU.
    # TODO(synk): production: replace with a DMA/take gather and tile the HWh axis.
    q = jax.lax.broadcasted_iota(jnp.int32, (HWl, HWh), 1)
    S = jnp.zeros((HWl, HWh), ACT_DTYPE)
    for xf, yf, wgt in corners:
        valid = (xf >= 0.0) & (xf <= Wh - 1.0) & (yf >= 0.0) & (yf <= Hh - 1.0)
        wgt_b = jnp.where(valid, wgt, 0.0).astype(ACT_DTYPE)             # (HWl, 1) bf16
        xi = jnp.clip(xf, 0.0, Wh - 1.0).astype(jnp.int32)
        yi = jnp.clip(yf, 0.0, Hh - 1.0).astype(jnp.int32)
        S = S + jnp.where(q == (yi * Wh + xi), wgt_b, jnp.zeros((), ACT_DTYPE))
    warped = jnp.dot(S, hf, preferred_element_type=jnp.float32)          # (HWl, fd)

    # residual: f = conv_x + flow_warp(hf)
    f = warped + conv_x
    f_ref[0] = f.astype(f_ref.dtype)

    # fpn_out: 3x3 conv + folded BN bias + ReLU (+ fused bilinear upsample to fusion size)
    fpn = jnp.maximum(
        _conv3x3_taps([f], wout_ref, msk_ref, wout_ref.shape[2], Wl) + bout_ref[...], 0.0)
    if has_up:
        fus = jnp.dot(ufus_ref[...], fpn.astype(ACT_DTYPE),
                      preferred_element_type=jnp.float32)
    else:
        fus = fpn
    fus_ref[0] = fus.astype(fus_ref.dtype)


# --------------------------------------------------------------------------- #
# Wrappers around pallas_call
# --------------------------------------------------------------------------- #
def psp_forward(feats, prm):
    """Fused PSP module. Returns (psp_out flat bf16 (N,HW,fd), psp_up flat f32 (N,HW0,fd))."""
    N, H, W, Cin = feats.shape
    fd, n = prm['fd'], prm['n_stages']
    HW, HW0 = H * W, prm['HW0']
    ins = (feats.reshape(N, HW, Cin).astype(ACT_DTYPE), prm['wall'], prm['pool'],
           prm['up'], prm['up0'], prm['bias'])
    out_shapes = (jax.ShapeDtypeStruct((N, HW, fd), ACT_DTYPE),
                  jax.ShapeDtypeStruct((N, HW0, fd), jnp.float32))
    in_specs = [pl.BlockSpec((1, HW, Cin), lambda b: (b, 0, 0)),
                _const_spec(prm['wall']), _const_spec(prm['pool']),
                _const_spec(prm['up']), _const_spec(prm['up0']), _const_spec(prm['bias'])]
    out_specs = [pl.BlockSpec((1, HW, fd), lambda b: (b, 0, 0)),
                 pl.BlockSpec((1, HW0, fd), lambda b: (b, 0, 0))]
    psp_out, psp_up = pl.pallas_call(
        functools.partial(_psp_kernel, n_stages=n, fd=fd),
        out_shape=out_shapes,
        grid_spec=pltpu.PrefetchScalarGridSpec(
            num_scalar_prefetch=0, grid=(N,), in_specs=in_specs, out_specs=out_specs),
        compiler_params=pltpu.CompilerParams(
            dimension_semantics=("parallel",),
            vmem_limit_bytes=_vmem_limit(ins, out_shapes)),
    )(*ins)
    return psp_out, psp_up


def level_forward(x, hf_flat, lp):
    """One fused FPN level.  x: (N,Hl,Wl,Cin) f32, hf_flat: (N,HWh,fd) bf16.

    Returns f (N,Hl,Wl,fd) f32 and its fpn_out fusion part (N,HW0,fd) f32.
    """
    N, Hl, Wl, Cin = x.shape
    fd = lp['W_in'].shape[1]
    Hh, Wh = lp['Hh'], lp['Wh']
    HWl, HWh = Hl * Wl, Hh * Wh
    HW0 = lp['H0'] * lp['W0']
    has_up = lp['U_fus'] is not None

    ins = [x.reshape(N, HWl, Cin).astype(ACT_DTYPE), hf_flat,
           lp['U_hf'], lp['W_in'], lp['b_in'], lp['W_dl'], lp['W_dh'],
           lp['W_flow'], lp['basegrid'], lp['tapmask'], lp['W_out'], lp['b_out']]
    in_specs = [pl.BlockSpec((1, HWl, Cin), lambda b: (b, 0, 0)),
                pl.BlockSpec((1, HWh, fd), lambda b: (b, 0, 0)),
                _const_spec(lp['U_hf']), _const_spec(lp['W_in']), _const_spec(lp['b_in']),
                _const_spec(lp['W_dl']), _const_spec(lp['W_dh']), _const_spec(lp['W_flow']),
                _const_spec(lp['basegrid']), _const_spec(lp['tapmask']),
                _const_spec(lp['W_out']), _const_spec(lp['b_out'])]
    if has_up:
        ins.append(lp['U_fus'])
        in_specs.append(_const_spec(lp['U_fus']))

    out_shapes = (jax.ShapeDtypeStruct((N, HWl, fd), jnp.float32),
                  jax.ShapeDtypeStruct((N, HW0, fd), jnp.float32))
    out_specs = [pl.BlockSpec((1, HWl, fd), lambda b: (b, 0, 0)),
                 pl.BlockSpec((1, HW0, fd), lambda b: (b, 0, 0))]

    f, fus = pl.pallas_call(
        functools.partial(_level_kernel, Hl=Hl, Wl=Wl, Hh=Hh, Wh=Wh, has_up=has_up),
        out_shape=out_shapes,
        grid_spec=pltpu.PrefetchScalarGridSpec(
            num_scalar_prefetch=0, grid=(N,), in_specs=in_specs, out_specs=out_specs),
        compiler_params=pltpu.CompilerParams(
            dimension_semantics=("parallel",),
            vmem_limit_bytes=_vmem_limit(ins, out_shapes)),
    )(*ins)
    return f.reshape(N, Hl, Wl, fd), fus


def align_head_forward(conv_out, params):
    N, H0, W0, _ = conv_out[0].shape
    fd = params['fpn_dim']

    psp_out, psp_up = psp_forward(conv_out[-1], params['ppm'])       # bf16 flat, f32 flat
    hf = psp_out                                                     # (N, HWh, fd) bf16
    outs, fusion_parts = [], {}
    for i in reversed(range(len(conv_out) - 1)):
        f, fus = level_forward(conv_out[i], hf, params['levels'][i])
        outs.append(f)
        fusion_parts[i] = fus
        hf = f.reshape(N, f.shape[1] * f.shape[2], fd).astype(ACT_DTYPE)

    # TODO(synk): at production sizes write the fusion parts straight into channel slices of a
    # preallocated buffer (input_output_aliases) instead of this XLA concatenate.
    fusion = jnp.concatenate([fusion_parts[i] for i in range(len(conv_out) - 1)] + [psp_up],
                             axis=-1)
    return fusion.reshape(N, H0, W0, -1), outs


# --------------------------------------------------------------------------- #
# Deterministic raw parameter init + host-side folding / precompute
# --------------------------------------------------------------------------- #
def init_bn(key, c):
    k1, k2, k3, k4 = jax.random.split(key, 4)
    gamma = 1.0 + 0.1 * jax.random.normal(k1, (c,))
    beta = 0.1 * jax.random.normal(k2, (c,))
    mean = 0.1 * jax.random.normal(k3, (c,))
    var = 1.0 + 0.1 * jax.random.uniform(k4, (c,))
    return (gamma.astype(jnp.float32), beta.astype(jnp.float32),
            mean.astype(jnp.float32), var.astype(jnp.float32))


def init_params(key, in_chans, fpn_inplanes, fpn_dim):
    keys = iter(jax.random.split(key, 64))
    nk = lambda: next(keys)

    def conv_w(cin, cout, k=1):
        fan_in = cin * k * k
        return (jax.random.normal(nk(), (k * k * cin, cout)) /
                np.sqrt(fan_in)).astype(jnp.float32)

    ppm = {'stages': []}
    for _ in (1, 2, 3, 6):
        ppm['stages'].append({'W': conv_w(in_chans, fpn_dim), 'bn': init_bn(nk(), fpn_dim)})
    ppm['bottleneck_W'] = conv_w(in_chans + 4 * fpn_dim, fpn_dim)
    ppm['bottleneck_bn'] = init_bn(nk(), fpn_dim)

    p = {'ppm': ppm, 'fpn_in': [], 'fpn_out': [], 'fpn_out_align': [], 'fpn_dim': fpn_dim}
    for cin in fpn_inplanes[:-1]:
        p['fpn_in'].append({
            'W': conv_w(cin, fpn_dim),
            'b': (0.1 * jax.random.normal(nk(), (fpn_dim,))).astype(jnp.float32),
            'bn': init_bn(nk(), fpn_dim),
        })
    for _ in range(len(fpn_inplanes) - 1):
        p['fpn_out'].append({'W': conv_w(fpn_dim, fpn_dim, 3), 'bn': init_bn(nk(), fpn_dim)})
        p['fpn_out_align'].append({
            'down_h': conv_w(fpn_dim, fpn_dim // 2),
            'down_l': conv_w(fpn_dim, fpn_dim // 2),
            'flow': conv_w(fpn_dim, 2, 3),
        })
    return p


def prepare_psp(ppm_raw, fd, H, W, H0, W0, sizes=(1, 2, 3, 6)):
    """Fold stage BN + bottleneck conv/BN into a single merged weight; build pool/up mats."""
    sb, cb = fold_bn(*ppm_raw['bottleneck_bn'])
    Wb = ppm_raw['bottleneck_W'] * sb[None, :]            # bottleneck BN scale folded in
    n = len(sizes)
    spad = 64                                             # >= max(size^2), multiple of 8
    pool = np.zeros((n, spad, H * W), np.float32)
    up = np.zeros((n, H * W, spad), np.float32)
    wcat = []
    bias_total = cb
    for si, s in enumerate(sizes):
        ss, bs = fold_bn(*ppm_raw['stages'][si]['bn'])
        Ws = ppm_raw['stages'][si]['W'] * ss[None, :]     # stage BN scale folded in
        Wb_s = Wb[si * fd:(si + 1) * fd, :]
        wcat.append(Ws @ Wb_s)                            # (Cin, fd)
        bias_total = bias_total + bs @ Wb_s               # stage BN bias through bottleneck
        k = s * s
        pool[si, :k, :] = adaptive_pool_matrix(H, W, s, s)
        up[si, :, :k] = bilinear_matrix(s, s, H, W)
    wall = jnp.concatenate(wcat + [Wb[n * fd:, :]], axis=1)   # (Cin, (n+1)*fd)
    return {
        'wall': wall.astype(ACT_DTYPE),
        'pool': jnp.asarray(pool).astype(ACT_DTYPE),
        'up': jnp.asarray(up).astype(ACT_DTYPE),
        'up0': jnp.asarray(bilinear_matrix(H, W, H0, W0)).astype(ACT_DTYPE),
        'bias': bias_total.reshape(1, fd).astype(jnp.float32),
        'spad': spad, 'n_stages': n, 'fd': fd, 'HW0': H0 * W0,
    }


def prepare_params(raw, conv_out):
    N, H0, W0, _ = conv_out[0].shape
    Hp, Wp = conv_out[-1].shape[1:3]
    fd = raw['fpn_dim']
    p = {'fpn_dim': fd, 'ppm': prepare_psp(raw['ppm'], fd, Hp, Wp, H0, W0), 'levels': []}
    for i in range(len(conv_out) - 1):
        Hl, Wl = conv_out[i].shape[1:3]
        Hh, Wh = conv_out[i + 1].shape[1:3]
        fi, fo, fa = raw['fpn_in'][i], raw['fpn_out'][i], raw['fpn_out_align'][i]
        s_in, b_in = fold_bn(*fi['bn'], conv_bias=fi['b'])
        s_out, b_out = fold_bn(*fo['bn'])
        C2 = fa['down_l'].shape[1]
        basegrid, tapmask = make_grid_consts(Hl, Wl)
        lvl = {
            'Hl': Hl, 'Wl': Wl, 'Hh': Hh, 'Wh': Wh, 'H0': H0, 'W0': W0,
            'W_in': (fi['W'] * s_in[None, :]).astype(ACT_DTYPE),
            'b_in': b_in.reshape(1, fd).astype(jnp.float32),
            'W_dl': fa['down_l'].astype(ACT_DTYPE),
            'W_dh': fa['down_h'].astype(ACT_DTYPE),
            'W_flow': fa['flow'].reshape(9, 2 * C2, 2).astype(ACT_DTYPE),
            'W_out': (fo['W'] * s_out[None, :]).reshape(9, fd, fd).astype(ACT_DTYPE),
            'b_out': b_out.reshape(1, fd).astype(jnp.float32),
            'U_hf': jnp.asarray(bilinear_matrix(Hh, Wh, Hl, Wl)).astype(ACT_DTYPE),
            'U_fus': (None if (Hl, Wl) == (H0, W0)
                      else jnp.asarray(bilinear_matrix(Hl, Wl, H0, W0)).astype(ACT_DTYPE)),
            'basegrid': jnp.asarray(basegrid),
            'tapmask': jnp.asarray(tapmask),
        }
        p['levels'].append(lvl)
    return p


# --------------------------------------------------------------------------- #
if __name__ == "__main__":
    key = jax.random.PRNGKey(0)
    kp, k0, k1, k2 = jax.random.split(key, 4)

    N = 2
    fpn_inplanes = [4, 8, 16]
    in_chans = 16
    fpn_dim = 32

    # conv_out: FPN pyramid (high-res -> low-res), NHWC layout.
    conv_out = [
        jax.random.normal(k0, (N, 16, 16, 4), jnp.float32),
        jax.random.normal(k1, (N, 8, 8, 8), jnp.float32),
        jax.random.normal(k2, (N, 4, 4, 16), jnp.float32),
    ]

    raw_params = init_params(kp, in_chans, fpn_inplanes, fpn_dim)
    params = prepare_params(raw_params, conv_out)

    fusion_out, outs = align_head_forward(conv_out, params)

    jax.block_until_ready(fusion_out)
    for o in outs:
        jax.block_until_ready(o)

    assert fusion_out.shape == (N, 16, 16, fpn_dim * len(conv_out))
    assert outs[0].shape == (N, 8, 8, fpn_dim)
    assert outs[1].shape == (N, 16, 16, fpn_dim)
    assert bool(jnp.all(jnp.isfinite(fusion_out)))
    print("KERNEL_OK")
</pallas_src>

<mosaic_0001>
module attributes {stable_mosaic.version = 11 : i64} {
  func.func @_psp_kernel(%arg0: i32, %arg1: memref<1x16x16xbf16, #tpu.memory_space<vmem>>, %arg2: memref<16x160xbf16, #tpu.memory_space<vmem>>, %arg3: memref<4x64x16xbf16, #tpu.memory_space<vmem>>, %arg4: memref<4x16x64xbf16, #tpu.memory_space<vmem>>, %arg5: memref<256x16xbf16, #tpu.memory_space<vmem>>, %arg6: memref<1x32xf32, #tpu.memory_space<vmem>>, %arg7: memref<1x16x32xbf16, #tpu.memory_space<vmem>>, %arg8: memref<1x256x32xf32, #tpu.memory_space<vmem>>) attributes {dimension_semantics = [#tpu.dimension_semantics<parallel>], iteration_bounds = array<i64: 2>, scalar_prefetch = 0 : i64, scratch_operands = 0 : i64, tpu.core_type = #tpu.core_type<tc>, window_params = [{transform_indices = @transform_0, window_bounds = array<i64: 1, 16, 16>}, {pipeline_mode = #tpu.pipeline_mode<synchronous>, transform_indices = @transform_1, window_bounds = array<i64: 16, 160>}, {pipeline_mode = #tpu.pipeline_mode<synchronous>, transform_indices = @transform_2, window_bounds = array<i64: 4, 64, 16>}, {pipeline_mode = #tpu.pipeline_mode<synchronous>, transform_indices = @transform_3, window_bounds = array<i64: 4, 16, 64>}, {pipeline_mode = #tpu.pipeline_mode<synchronous>, transform_indices = @transform_4, window_bounds = array<i64: 256, 16>}, {pipeline_mode = #tpu.pipeline_mode<synchronous>, transform_indices = @transform_5, window_bounds = array<i64: 1, 32>}, {transform_indices = @transform_6, window_bounds = array<i64: 1, 16, 32>}, {transform_indices = @transform_7, window_bounds = array<i64: 1, 256, 32>}]} {
    %c0 = arith.constant 0 : index
    %c0_0 = arith.constant 0 : index
    %c0_1 = arith.constant 0 : index
    %0 = vector.load %arg1[%c0, %c0_0, %c0_1] : memref<1x16x16xbf16, #tpu.memory_space<vmem>>, vector<1x16x16xbf16>
    %1 = vector.shape_cast %0 : vector<1x16x16xbf16> to vector<16x16xbf16>
    %c0_2 = arith.constant 0 : index
    %c0_3 = arith.constant 0 : index
    %2 = vector.load %arg2[%c0_2, %c0_3] : memref<16x160xbf16, #tpu.memory_space<vmem>>, vector<16x160xbf16>
    %cst = arith.constant dense<0.000000e+00> : vector<16x160xf32>
    %3 = tpu.matmul %1, %2, %cst {dimension_numbers = #tpu.dot_dimension_numbers<[1], [0], [0], [1], [0, 0, 1, 1], [], []>} : vector<16x16xbf16>, vector<16x160xbf16>, vector<16x160xf32> -> vector<16x160xf32>
    %4 = vector.extract_strided_slice %3 {offsets = [0, 128], sizes = [16, 32], strides = [1, 1]} : vector<16x160xf32> to vector<16x32xf32>
    %5 = vector.extract_strided_slice %3 {offsets = [0, 0], sizes = [16, 128], strides = [1, 1]} : vector<16x160xf32> to vector<16x128xf32>
    %6 = arith.truncf %5 : vector<16x128xf32> to vector<16x128xbf16>
    %7 = vector.extract_strided_slice %6 {offsets = [0, 0], sizes = [16, 32], strides = [1, 1]} : vector<16x128xbf16> to vector<16x32xbf16>
    %c0_4 = arith.constant 0 : index
    %c0_5 = arith.constant 0 : index
    %c0_6 = arith.constant 0 : index
    %8 = vector.load %arg3[%c0_4, %c0_5, %c0_6] : memref<4x64x16xbf16, #tpu.memory_space<vmem>>, vector<1x64x16xbf16>
    %9 = vector.shape_cast %8 : vector<1x64x16xbf16> to vector<64x16xbf16>
    %cst_7 = arith.constant dense<0.000000e+00> : vector<64x32xf32>
    %10 = tpu.matmul %9, %7, %cst_7 {dimension_numbers = #tpu.dot_dimension_numbers<[1], [0], [0], [1], [0, 0, 1, 1], [], []>} : vector<64x16xbf16>, vector<16x32xbf16>, vector<64x32xf32> -> vector<64x32xf32>
    %c0_8 = arith.constant 0 : index
    %c0_9 = arith.constant 0 : index
    %c0_10 = arith.constant 0 : index
    %11 = vector.load %arg4[%c0_8, %c0_9, %c0_10] : memref<4x16x64xbf16, #tpu.memory_space<vmem>>, vector<1x16x64xbf16>
    %12 = vector.shape_cast %11 : vector<1x16x64xbf16> to vector<16x64xbf16>
    %13 = arith.truncf %10 : vector<64x32xf32> to vector<64x32xbf16>
    %cst_11 = arith.constant dense<0.000000e+00> : vector<16x32xf32>
    %14 = tpu.matmul %12, %13, %cst_11 {dimension_numbers = #tpu.dot_dimension_numbers<[1], [0], [0], [1], [0, 0, 1, 1], [], []>} : vector<16x64xbf16>, vector<64x32xbf16>, vector<16x32xf32> -> vector<16x32xf32>
    %15 = arith.addf %4, %14 : vector<16x32xf32>
    %16 = vector.extract_strided_slice %6 {offsets = [0, 32], sizes = [16, 32], strides = [1, 1]} : vector<16x128xbf16> to vector<16x32xbf16>
    %c1 = arith.constant 1 : index
    %c0_12 = arith.constant 0 : index
    %c0_13 = arith.constant 0 : index
    %17 = vector.load %arg3[%c1, %c0_12, %c0_13] : memref<4x64x16xbf16, #tpu.memory_space<vmem>>, vector<1x64x16xbf16>
    %18 = vector.shape_cast %17 : vector<1x64x16xbf16> to vector<64x16xbf16>
    %cst_14 = arith.constant dense<0.000000e+00> : vector<64x32xf32>
    %19 = tpu.matmul %18, %16, %cst_14 {dimension_numbers = #tpu.dot_dimension_numbers<[1], [0], [0], [1], [0, 0, 1, 1], [], []>} : vector<64x16xbf16>, vector<16x32xbf16>, vector<64x32xf32> -> vector<64x32xf32>
    %c1_15 = arith.constant 1 : index
    %c0_16 = arith.constant 0 : index
    %c0_17 = arith.constant 0 : index
    %20 = vector.load %arg4[%c1_15, %c0_16, %c0_17] : memref<4x16x64xbf16, #tpu.memory_space<vmem>>, vector<1x16x64xbf16>
    %21 = vector.shape_cast %20 : vector<1x16x64xbf16> to vector<16x64xbf16>
    %22 = arith.truncf %19 : vector<64x32xf32> to vector<64x32xbf16>
    %cst_18 = arith.constant dense<0.000000e+00> : vector<16x32xf32>
    %23 = tpu.matmul %21, %22, %cst_18 {dimension_numbers = #tpu.dot_dimension_numbers<[1], [0], [0], [1], [0, 0, 1, 1], [], []>} : vector<16x64xbf16>, vector<64x32xbf16>, vector<16x32xf32> -> vector<16x32xf32>
    %24 = arith.addf %15, %23 : vector<16x32xf32>
    %25 = vector.extract_strided_slice %6 {offsets = [0, 64], sizes = [16, 32], strides = [1, 1]} : vector<16x128xbf16> to vector<16x32xbf16>
    %c2 = arith.constant 2 : index
    %c0_19 = arith.constant 0 : index
    %c0_20 = arith.constant 0 : index
    %26 = vector.load %arg3[%c2, %c0_19, %c0_20] : memref<4x64x16xbf16, #tpu.memory_space<vmem>>, vector<1x64x16xbf16>
    %27 = vector.shape_cast %26 : vector<1x64x16xbf16> to vector<64x16xbf16>
    %cst_21 = arith.constant dense<0.000000e+00> : vector<64x32xf32>
    %28 = tpu.matmul %27, %25, %cst_21 {dimension_numbers = #tpu.dot_dimension_numbers<[1], [0], [0], [1], [0, 0, 1, 1], [], []>} : vector<64x16xbf16>, vector<16x32xbf16>, vector<64x32xf32> -> vector<64x32xf32>
    %c2_22 = arith.constant 2 : index
    %c0_23 = arith.constant 0 : index
    %c0_24 = arith.constant 0 : index
    %29 = vector.load %arg4[%c2_22, %c0_23, %c0_24] : memref<4x16x64xbf16, #tpu.memory_space<vmem>>, vector<1x16x64xbf16>
    %30 = vector.shape_cast %29 : vector<1x16x64xbf16> to vector<16x64xbf16>
    %31 = arith.truncf %28 : vector<64x32xf32> to vector<64x32xbf16>
    %cst_25 = arith.constant dense<0.000000e+00> : vector<16x32xf32>
    %32 = tpu.matmul %30, %31, %cst_25 {dimension_numbers = #tpu.dot_dimension_numbers<[1], [0], [0], [1], [0, 0, 1, 1], [], []>} : vector<16x64xbf16>, vector<64x32xbf16>, vector<16x32xf32> -> vector<16x32xf32>
    %33 = arith.addf %24, %32 : vector<16x32xf32>
    %34 = vector.extract_strided_slice %6 {offsets = [0, 96], sizes = [16, 32], strides = [1, 1]} : vector<16x128xbf16> to vector<16x32xbf16>
    %c3 = arith.constant 3 : index
    %c0_26 = arith.constant 0 : index
    %c0_27 = arith.constant 0 : index
    %35 = vector.load %arg3[%c3, %c0_26, %c0_27] : memref<4x64x16xbf16, #tpu.memory_space<vmem>>, vector<1x64x16xbf16>
    %36 = vector.shape_cast %35 : vector<1x64x16xbf16> to vector<64x16xbf16>
    %cst_28 = arith.constant dense<0.000000e+00> : vector<64x32xf32>
    %37 = tpu.matmul %36, %34, %cst_28 {dimension_numbers = #tpu.dot_dimension_numbers<[1], [0], [0], [1], [0, 0, 1, 1], [], []>} : vector<64x16xbf16>, vector<16x32xbf16>, vector<64x32xf32> -> vector<64x32xf32>
    %c3_29 = arith.constant 3 : index
    %c0_30 = arith.constant 0 : index
    %c0_31 = arith.constant 0 : index
    %38 = vector.load %arg4[%c3_29, %c0_30, %c0_31] : memref<4x16x64xbf16, #tpu.memory_space<vmem>>, vector<1x16x64xbf16>
    %39 = vector.shape_cast %38 : vector<1x16x64xbf16> to vector<16x64xbf16>
    %40 = arith.truncf %37 : vector<64x32xf32> to vector<64x32xbf16>
    %cst_32 = arith.constant dense<0.000000e+00> : vector<16x32xf32>
    %41 = tpu.matmul %39, %40, %cst_32 {dimension_numbers = #tpu.dot_dimension_numbers<[1], [0], [0], [1], [0, 0, 1, 1], [], []>} : vector<16x64xbf16>, vector<64x32xbf16>, vector<16x32xf32> -> vector<16x32xf32>
    %42 = arith.addf %33, %41 : vector<16x32xf32>
    %c0_33 = arith.constant 0 : index
    %c0_34 = arith.constant 0 : index
    %43 = vector.load %arg6[%c0_33, %c0_34] : memref<1x32xf32, #tpu.memory_space<vmem>>, vector<1x32xf32>
    %44 = vector.broadcast %43 : vector<1x32xf32> to vector<16x32xf32>
    %45 = arith.addf %42, %44 : vector<16x32xf32>
    %cst_35 = arith.constant 0.000000e+00 : f32
    %46 = vector.broadcast %cst_35 : f32 to vector<16x32xf32>
    %47 = arith.maximumf %45, %46 : vector<16x32xf32>
    %48 = arith.truncf %47 : vector<16x32xf32> to vector<16x32xbf16>
    %c0_36 = arith.constant 0 : index
    %c0_37 = arith.constant 0 : index
    %c0_38 = arith.constant 0 : index
    %49 = vector.load %arg7[%c0_36, %c0_37, %c0_38] : memref<1x16x32xbf16, #tpu.memory_space<vmem>>, vector<1x16x32xbf16>
    %50 = vector.shape_cast %49 : vector<1x16x32xbf16> to vector<16x32xbf16>
    %51 = vector.shape_cast %48 : vector<16x32xbf16> to vector<1x16x32xbf16>
    tpu.vector_store %arg7[%c0_36, %c0_37, %c0_38], %51 {strides = array<i32>} : memref<1x16x32xbf16, #tpu.memory_space<vmem>>, vector<1x16x32xbf16>,
    %c0_39 = arith.constant 0 : index
    %c0_40 = arith.constant 0 : index
    %52 = vector.load %arg5[%c0_39, %c0_40] : memref<256x16xbf16, #tpu.memory_space<vmem>>, vector<256x16xbf16>
    %53 = arith.truncf %47 : vector<16x32xf32> to vector<16x32xbf16>
    %cst_41 = arith.constant dense<0.000000e+00> : vector<256x32xf32>
    %54 = tpu.matmul %52, %53, %cst_41 {dimension_numbers = #tpu.dot_dimension_numbers<[1], [0], [0], [1], [0, 0, 1, 1], [], []>} : vector<256x16xbf16>, vector<16x32xbf16>, vector<256x32xf32> -> vector<256x32xf32>
    %c0_42 = arith.constant 0 : index
    %c0_43 = arith.constant 0 : index
    %c0_44 = arith.constant 0 : index
    %55 = vector.load %arg8[%c0_42, %c0_43, %c0_44] : memref<1x256x32xf32, #tpu.memory_space<vmem>>, vector<1x256x32xf32>
    %56 = vector.shape_cast %55 : vector<1x256x32xf32> to vector<256x32xf32>
    %57 = vector.shape_cast %54 : vector<256x32xf32> to vector<1x256x32xf32>
    tpu.vector_store %arg8[%c0_42, %c0_43, %c0_44], %57 {strides = array<i32>} : memref<1x256x32xf32, #tpu.memory_space<vmem>>, vector<1x256x32xf32>,
    return
  }
  func.func @transform_0(%arg0: i32) -> (i32, i32, i32) {
    %c0_i32 = arith.constant 0 : i32
    %c0_i32_0 = arith.constant 0 : i32
    %c0_i32_1 = arith.constant 0 : i32
    return %arg0, %c0_i32, %c0_i32_0 : i32, i32, i32
  }
  func.func @transform_1(%arg0: i32) -> (i32, i32) {
    %c0_i32 = arith.constant 0 : i32
    %c0_i32_0 = arith.constant 0 : i32
    %c0_i32_1 = arith.constant 0 : i32
    return %c0_i32, %c0_i32_0 : i32, i32
  }
  func.func @transform_2(%arg0: i32) -> (i32, i32, i32) {
    %c0_i32 = arith.constant 0 : i32
    %c0_i32_0 = arith.constant 0 : i32
    %c0_i32_1 = arith.constant 0 : i32
    %c0_i32_2 = arith.constant 0 : i32
    return %c0_i32, %c0_i32_0, %c0_i32_1 : i32, i32, i32
  }
  func.func @transform_3(%arg0: i32) -> (i32, i32, i32) {
    %c0_i32 = arith.constant 0 : i32
    %c0_i32_0 = arith.constant 0 : i32
    %c0_i32_1 = arith.constant 0 : i32
    %c0_i32_2 = arith.constant 0 : i32
    return %c0_i32, %c0_i32_0, %c0_i32_1 : i32, i32, i32
  }
  func.func @transform_4(%arg0: i32) -> (i32, i32) {
    %c0_i32 = arith.constant 0 : i32
    %c0_i32_0 = arith.constant 0 : i32
    %c0_i32_1 = arith.constant 0 : i32
    return %c0_i32, %c0_i32_0 : i32, i32
  }
  func.func @transform_5(%arg0: i32) -> (i32, i32) {
    %c0_i32 = arith.constant 0 : i32
    %c0_i32_0 = arith.constant 0 : i32
    %c0_i32_1 = arith.constant 0 : i32
    return %c0_i32, %c0_i32_0 : i32, i32
  }
  func.func @transform_6(%arg0: i32) -> (i32, i32, i32) {
    %c0_i32 = arith.constant 0 : i32
    %c0_i32_0 = arith.constant 0 : i32
    %c0_i32_1 = arith.constant 0 : i32
    return %arg0, %c0_i32, %c0_i32_0 : i32, i32, i32
  }
  func.func @transform_7(%arg0: i32) -> (i32, i32, i32) {
    %c0_i32 = arith.constant 0 : i32
    %c0_i32_0 = arith.constant 0 : i32
    %c0_i32_1 = arith.constant 0 : i32
    return %arg0, %c0_i32, %c0_i32_0 : i32, i32, i32
  }
}

</mosaic_0001>

<llo_original>
// kernel: tpu_custom_call.1
$region0: #{tpu_custom_call.1}
  #allocation0 [shape = 'u32[]', space=smem, size = 0x4, offset = 0x4, fixed_abs, tag = 'smem constant byte address 0x4 - core index']
  #allocation1 [shape = 'u32[144,128]{1,0:T(1,128)}', space=vmem, size = 0x12000, scoped, tag = 'internal scratch']
  %s0 = inlined_call_operand.vmem [shape: bf16[2,16,16], index: 0, kind: input, shape index: {}]
  %s1 = inlined_call_operand.vmem [shape: bf16[16,160], index: 1, kind: input, shape index: {}]
  %s2 = inlined_call_operand.vmem [shape: bf16[4,64,16], index: 2, kind: input, shape index: {}]
  %s3 = inlined_call_operand.vmem [shape: bf16[4,16,64], index: 3, kind: input, shape index: {}]
  %s4 = inlined_call_operand.vmem [shape: bf16[256,16], index: 4, kind: input, shape index: {}]
  %s5 = inlined_call_operand.vmem [shape: f32[1,32], index: 5, kind: input, shape index: {}]
  %s6 = inlined_call_operand.hbm [shape: bf16[2,16,32], index: 6, kind: output, shape index: {0}]
  %s7 = inlined_call_operand.vmem [shape: f32[2,256,32], index: 7, kind: output, shape index: {1}]
  %8 = xla_tuple %s6, %s7
  %s9 = sld [smem:[#allocation0]]
  $region65: #{tpu_custom_call.1} parent=0
    _
  %s11 = ssub.s32 1, %s9
  %s12 = scalar_select 0, %s11, %s9
  $region1: #{tpu_custom_call.1} parent=0
    #allocation2 [shape = 'u8[8192]{0}', space=vmem, size = 0x2000, scoped, tag = 'output window, operand 0']
    #allocation3 [shape = 's32[2]{0}', space=sflag, size = 0x8, scoped, tag = 'scoped memory for tpu_custom_call.1']
    %13 = vsyncpa [#allocation3], 0
    %s14 = scalar_lea.sflag [#allocation3], 1
    %15 = vsyncpa %s14, 0
    loop: start=0, step=1, limit=4
    $region2: #{tpu_custom_call.1} parent=1 // loop_pre_header
      _
    $region3: #{tpu_custom_call.1} parent=1 // loop_header
      %s17 = sphi 0, %s21
      %p18 = scmp.ge.s32.totalorder %s17, 4
      %s27 = sphi 0, %s29
      %s30 = sphi 0, %s27
      %s31 = sphi 0, %s30
      %s47 = sphi 0, %s31
      %s51 = sphi 0, %s51
      %s53 = sphi 0, %s51
      %s54 = sphi 0, %s53
      %s68 = sphi 0, %s54
      %s72 = sphi 0, %s72
      %s74 = sphi 0, %s72
      %s75 = sphi 0, %s74
      %s89 = sphi 0, %s75
      %s93 = sphi 0, %s93
      %s95 = sphi 0, %s93
      %s96 = sphi 0, %s95
      %s110 = sphi 0, %s96
      %s114 = sphi 0, %s114
      %s116 = sphi 0, %s114
      %s117 = sphi 0, %s116
      %s131 = sphi 0, %s117
      %s135 = sphi 0, %s135
      %s137 = sphi 0, %s135
      %s138 = sphi 0, %s137
      %s152 = sphi 0, %s138
      %s158 = sphi 0, %s160
      %s161 = sphi 0, %s158
      %s162 = sphi 0, %s161
      %s178 = sphi 0, %s162
      %s184 = sphi 0, %s186
      %s187 = sphi 0, %s184
      %s188 = sphi 0, %s187
      %s204 = sphi 0, %s188
    $region4: #{tpu_custom_call.1} parent=1 // loop_header_branch
      %20 = sbr.rel (%p18) target = $region8
    $region5: #{tpu_custom_call.1} parent=1 // loop_body
      %s22 = ssub.s32 %s17, 1
      %s23 = ssub.s32 %s17, 2
      %s24 = sadd.s32 %s17, 1
      %s25 = ssub.s32 %s17, %s24
      %p26 = scmp.eq.s32.totalorder %s25, 0
      %s28 = sadd.s32 %s27, 1
      %s29 = scalar_select %p26, %s27, %s28
      %p32 = pneg %p26
      %p33 = scmp.eq.s32.totalorder %s17, 1
      %p34 = por %p32, %p33
      %p35 = scmp.ne.s32.totalorder %s27, %s30
      %p36 = scmp.eq.s32.totalorder %s17, 0
      %p37 = por %p35, %p36
      %p38 = scmp.ne.s32.totalorder %s27, %s30
      %p39 = scmp.eq.s32.totalorder %s22, 1
      %p40 = por %p38, %p39
      %p41 = scmp.ne.s32.totalorder %s30, %s31
      %p42 = scmp.eq.s32.totalorder %s22, 0
      %p43 = por %p41, %p42
      %p44 = scmp.ne.s32.totalorder %s30, %s31
      %p45 = scmp.eq.s32.totalorder %s23, 1
      %p46 = por %p44, %p45
      %p48 = scmp.ne.s32.totalorder %s31, %s47
      %p49 = scmp.eq.s32.totalorder %s23, 0
      %p50 = por %p48, %p49
      %s52 = sadd.s32 %s51, 1
      %p55 = scmp.eq.s32.totalorder %s17, 1
      %p56 = scmp.ne.s32.totalorder %s51, %s53
      %p57 = scmp.eq.s32.totalorder %s17, 0
      %p58 = por %p56, %p57
      %p59 = scmp.ne.s32.totalorder %s51, %s53
      %p60 = scmp.eq.s32.totalorder %s22, 1
      %p61 = por %p59, %p60
      %p62 = scmp.ne.s32.totalorder %s53, %s54
      %p63 = scmp.eq.s32.totalorder %s22, 0
      %p64 = por %p62, %p63
      %p65 = scmp.ne.s32.totalorder %s53, %s54
      %p66 = scmp.eq.s32.totalorder %s23, 1
      %p67 = por %p65, %p66
      %p69 = scmp.ne.s32.totalorder %s54, %s68
      %p70 = scmp.eq.s32.totalorder %s23, 0
      %p71 = por %p69, %p70
      %s73 = sadd.s32 %s72, 1
      %p76 = scmp.eq.s32.totalorder %s17, 1
      %p77 = scmp.ne.s32.totalorder %s72, %s74
      %p78 = scmp.eq.s32.totalorder %s17, 0
      %p79 = por %p77, %p78
      %p80 = scmp.ne.s32.totalorder %s72, %s74
      %p81 = scmp.eq.s32.totalorder %s22, 1
      %p82 = por %p80, %p81
      %p83 = scmp.ne.s32.totalorder %s74, %s75
      %p84 = scmp.eq.s32.totalorder %s22, 0
      %p85 = por %p83, %p84
      %p86 = scmp.ne.s32.totalorder %s74, %s75
      %p87 = scmp.eq.s32.totalorder %s23, 1
      %p88 = por %p86, %p87
      %p90 = scmp.ne.s32.totalorder %s75, %s89
      %p91 = scmp.eq.s32.totalorder %s23, 0
      %p92 = por %p90, %p91
      %s94 = sadd.s32 %s93, 1
      %p97 = scmp.eq.s32.totalorder %s17, 1
      %p98 = scmp.ne.s32.totalorder %s93, %s95
      %p99 = scmp.eq.s32.totalorder %s17, 0
      %p100 = por %p98, %p99
      %p101 = scmp.ne.s32.totalorder %s93, %s95
      %p102 = scmp.eq.s32.totalorder %s22, 1
      %p103 = por %p101, %p102
      %p104 = scmp.ne.s32.totalorder %s95, %s96
      %p105 = scmp.eq.s32.totalorder %s22, 0
      %p106 = por %p104, %p105
      %p107 = scmp.ne.s32.totalorder %s95, %s96
      %p108 = scmp.eq.s32.totalorder %s23, 1
      %p109 = por %p107, %p108
      %p111 = scmp.ne.s32.totalorder %s96, %s110
      %p112 = scmp.eq.s32.totalorder %s23, 0
      %p113 = por %p111, %p112
      %s115 = sadd.s32 %s114, 1
      %p118 = scmp.eq.s32.totalorder %s17, 1
      %p119 = scmp.ne.s32.totalorder %s114, %s116
      %p120 = scmp.eq.s32.totalorder %s17, 0
      %p121 = por %p119, %p120
      %p122 = scmp.ne.s32.totalorder %s114, %s116
      %p123 = scmp.eq.s32.totalorder %s22, 1
      %p124 = por %p122, %p123
      %p125 = scmp.ne.s32.totalorder %s116, %s117
      %p126 = scmp.eq.s32.totalorder %s22, 0
      %p127 = por %p125, %p126
      %p128 = scmp.ne.s32.totalorder %s116, %s117
      %p129 = scmp.eq.s32.totalorder %s23, 1
      %p130 = por %p128, %p129
      %p132 = scmp.ne.s32.totalorder %s117, %s131
      %p133 = scmp.eq.s32.totalorder %s23, 0
      %p134 = por %p132, %p133
      %s136 = sadd.s32 %s135, 1
      %p139 = scmp.eq.s32.totalorder %s17, 1
      %p140 = scmp.ne.s32.totalorder %s135, %s137
      %p141 = scmp.eq.s32.totalorder %s17, 0
      %p142 = por %p140, %p141
      %p143 = scmp.ne.s32.totalorder %s135, %s137
      %p144 = scmp.eq.s32.totalorder %s22, 1
      %p145 = por %p143, %p144
      %p146 = scmp.ne.s32.totalorder %s137, %s138
      %p147 = scmp.eq.s32.totalorder %s22, 0
      %p148 = por %p146, %p147
      %p149 = scmp.ne.s32.totalorder %s137, %s138
      %p150 = scmp.eq.s32.totalorder %s23, 1
      %p151 = por %p149, %p150
      %p153 = scmp.ne.s32.totalorder %s138, %s152
      %p154 = scmp.eq.s32.totalorder %s23, 0
      %p155 = por %p153, %p154
      %s156 = ssub.s32 %s17, %s24
      %p157 = scmp.eq.s32.totalorder %s156, 0
      %s159 = sadd.s32 %s158, 1
      %s160 = scalar_select %p157, %s158, %s159
      %p163 = pneg %p157
      %p164 = scmp.eq.s32.totalorder %s17, 1
      %p165 = por %p163, %p164
      %p166 = scmp.ne.s32.totalorder %s158, %s161
      %p167 = scmp.eq.s32.totalorder %s17, 0
      %p168 = por %p166, %p167
      %p169 = scmp.ne.s32.totalorder %s158, %s161
      %p170 = scmp.eq.s32.totalorder %s22, 1
      %p171 = por %p169, %p170
      %p172 = scmp.ne.s32.totalorder %s161, %s162
      %p173 = scmp.eq.s32.totalorder %s22, 0
      %p174 = por %p172, %p173
      %p175 = scmp.ne.s32.totalorder %s161, %s162
      %p176 = scmp.eq.s32.totalorder %s23, 1
      %p177 = por %p175, %p176
      %p179 = scmp.ne.s32.totalorder %s162, %s178
      %p180 = scmp.eq.s32.totalorder %s23, 0
      %p181 = por %p179, %p180
      %s182 = ssub.s32 %s17, %s24
      %p183 = scmp.eq.s32.totalorder %s182, 0
      %s185 = sadd.s32 %s184, 1
      %s186 = scalar_select %p183, %s184, %s185
      %p189 = pneg %p183
      %p190 = scmp.eq.s32.totalorder %s17, 1
      %p191 = por %p189, %p190
      %p192 = scmp.ne.s32.totalorder %s184, %s187
      %p193 = scmp.eq.s32.totalorder %s17, 0
      %p194 = por %p192, %p193
      %p195 = scmp.ne.s32.totalorder %s184, %s187
      %p196 = scmp.eq.s32.totalorder %s22, 1
      %p197 = por %p195, %p196
      %p198 = scmp.ne.s32.totalorder %s187, %s188
      %p199 = scmp.eq.s32.totalorder %s22, 0
      %p200 = por %p198, %p199
      %p201 = scmp.ne.s32.totalorder %s187, %s188
      %p202 = scmp.eq.s32.totalorder %s23, 1
      %p203 = por %p201, %p202
      %p205 = scmp.ne.s32.totalorder %s188, %s204
      %p206 = scmp.eq.s32.totalorder %s23, 0
      %p207 = por %p205, %p206
      %p208 = scmp.le.s32.totalorder 1, %s17
      %p209 = scmp.lt.s32.totalorder %s17, 3
      %p210 = pnand %p208, %p209
      %p211 = pneg %p210
      // Predicated region
      $region9: #{tpu_custom_call.1} parent=5 // pred_check
        _
      $region10: #{tpu_custom_call.1} parent=5 // pred_check_branch
        %213 = sbr.rel (%p210) target = $region12
      $region11: #{tpu_custom_call.1} parent=5 // pred_region
        %s214 = ssub.s32 %s17, 1
        // Predicated region
        $region13: #{tpu_custom_call.1} parent=11 // pred_check
          %p215 = pneg %p64
        $region14: #{tpu_custom_call.1} parent=11 // pred_check_branch
          %217 = sbr.rel (%p215) target = $region16
        $region15: #{tpu_custom_call.1} parent=11 // pred_region
          _
        $region16: #{tpu_custom_call.1} parent=11 // pred_fallthru
          _
        // Predicated region
        $region17: #{tpu_custom_call.1} parent=11 // pred_check
          %p218 = pneg %p85
        $region18: #{tpu_custom_call.1} parent=11 // pred_check_branch
          %220 = sbr.rel (%p218) target = $region20
        $region19: #{tpu_custom_call.1} parent=11 // pred_region
          _
        $region20: #{tpu_custom_call.1} parent=11 // pred_fallthru
          _
        // Predicated region
        $region21: #{tpu_custom_call.1} parent=11 // pred_check
          %p221 = pneg %p106
        $region22: #{tpu_custom_call.1} parent=11 // pred_check_branch
          %223 = sbr.rel (%p221) target = $region24
        $region23: #{tpu_custom_call.1} parent=11 // pred_region
          _
        $region24: #{tpu_custom_call.1} parent=11 // pred_fallthru
          _
        // Predicated region
        $region25: #{tpu_custom_call.1} parent=11 // pred_check
          %p224 = pneg %p127
        $region26: #{tpu_custom_call.1} parent=11 // pred_check_branch
          %226 = sbr.rel (%p224) target = $region28
        $region27: #{tpu_custom_call.1} parent=11 // pred_region
          _
        $region28: #{tpu_custom_call.1} parent=11 // pred_fallthru
          _
        // Predicated region
        $region29: #{tpu_custom_call.1} parent=11 // pred_check
          %p227 = pneg %p148
        $region30: #{tpu_custom_call.1} parent=11 // pred_check_branch
          %229 = sbr.rel (%p227) target = $region32
        $region31: #{tpu_custom_call.1} parent=11 // pred_region
          _
        $region32: #{tpu_custom_call.1} parent=11 // pred_fallthru
          _
      $region12: #{tpu_custom_call.1} parent=5 // pred_fallthru
        _
      %p230 = scmp.lt.s32.totalorder %s17, 2
      // Predicated region
      $region33: #{tpu_custom_call.1} parent=5 // pred_check
        %p231 = pneg %p230
      $region34: #{tpu_custom_call.1} parent=5 // pred_check_branch
        %233 = sbr.rel (%p231) target = $region36
      $region35: #{tpu_custom_call.1} parent=5 // pred_region
        // Predicated region
        $region37: #{tpu_custom_call.1} parent=35 // pred_check
          %p234 = pneg %p37
        $region38: #{tpu_custom_call.1} parent=35 // pred_check_branch
          %236 = sbr.rel (%p234) target = $region40
        $region39: #{tpu_custom_call.1} parent=35 // pred_region
          %p237 = scmp.lt.s32.totalorder %s17, 1
          %s238 = scalar_select %p237, %s17, 1
          %s239 = smul.addr %s238, 2
          %s240 = smul.addr %s239, 4
          %s241 = scalar_lea.vmem %s0, %s240
        $region40: #{tpu_custom_call.1} parent=35 // pred_fallthru
          _
      $region36: #{tpu_custom_call.1} parent=5 // pred_fallthru
        _
      %p242 = scmp.le.s32.totalorder 1, %s17
      %p243 = scmp.lt.s32.totalorder %s17, 3
      %p244 = pnand %p242, %p243
      %p245 = pneg %p244
      // Predicated region
      $region41: #{tpu_custom_call.1} parent=5 // pred_check
        _
      $region42: #{tpu_custom_call.1} parent=5 // pred_check_branch
        %247 = sbr.rel (%p244) target = $region44
      $region43: #{tpu_custom_call.1} parent=5 // pred_region
        %s248 = ssub.s32 %s17, 1
        %p249 = scmp.lt.s32.totalorder %s22, 1
        %s250 = scalar_select %p249, %s22, 1
        %s251 = smul.addr %s250, 2
        %s252 = smul.addr %s251, 4
        %s253 = scalar_lea.vmem %s0, %s252
        %p254 = pneg %p43
        %p255 = pneg %p40
        %p256 = pneg %p64
        %p257 = pneg %p61
        %p258 = pneg %p85
        %p259 = pneg %p82
        %p260 = pneg %p106
        %p261 = pneg %p103
        %p262 = pneg %p127
        %p263 = pneg %p124
        %p264 = pneg %p148
        %p265 = pneg %p145
        %p266 = pneg %p174
        %p267 = pneg %p171
        %s268 = sand.u32 %s161, 1
        %s269 = scalar_lea.sflag [#allocation3], %s268
        %s270 = sand.u32 %s161, 1
        %s271 = smul.addr %s270, 8
        %s272 = scalar_lea.vmem [#allocation2], %s271
        %p273 = pneg %p200
        %p274 = pneg %p197
        %p275 = scmp.lt.s32.totalorder %s22, 1
        %s276 = scalar_select %p275, %s22, 1
        %s277 = smul.addr %s276, 32
        %s278 = smul.addr %s277, 8
        %s279 = scalar_lea.vmem %s7, %s278
        %p280 = scmp.lt.s32.totalorder %s22, 1
        %s281 = scalar_select %p280, %s22, 1
        %s282 = smul.addr %s281, 2
        %s283 = smul.addr %s282, 4
        %s284 = scalar_lea.vmem %s0, %s283
        %p285 = scmp.lt.s32.totalorder %s22, 1
        %s286 = scalar_select %p285, %s22, 1
        %s287 = smul.addr %s286, 32
        %s288 = smul.addr %s287, 8
        %s289 = scalar_lea.vmem %s7, %s288
        %v291 = vld [vmem:[%s284] sm:$0xf]
        %v292 = vld [vmem:[%s284 + $0x4] sm:$0xf]
        %v293 = vld [vmem:[%s1] sm:$0xff]
        %v294 = vld [vmem:[%s1 + $0x8] sm:$0xff]
        %v297 = vunpack.c.l.b16 %v291
        %v298 = vunpack.c.l.b16 %v292
        %v299 = vpack.c.b16 %v298, %v297
        %v302 = vunpack.c.l.b16 %v293
        %v303 = vunpack.c.h.b16 %v293
        %v304 = vunpack.c.l.b16 %v294
        %v305 = vunpack.c.h.b16 %v294
        %v306 = vpack.c.b16 %v304, %v302
        %v307 = vpack.c.b16 %v305, %v303
        %vm310 = vcmask 130048
        %v312 = vsel %vm310, %v299, 0
        %314 = vmatprep.subr.bf16.mxu0 %v307
        %315 = vmatpush1.bf16.msra.mxu0 %v306
        %316 = vmatprep.subr.bf16.mxu0 0
        %317 = vmatpush1.bf16.msra.mxu0 0
        %318 = vmatprep.subr.bf16.mxu0 0
        %319 = vmatpush1.bf16.msra.mxu0 0
        %320 = vmatprep.subr.bf16.mxu0 0
        %321 = vmatpush1.bf16.msra.mxu0 0
        %322 = vmatprep.subr.bf16.mxu0 0
        %323 = vmatpush1.bf16.msra.mxu0 0
        %324 = vmatprep.subr.bf16.mxu0 0
        %325 = vmatpush1.bf16.msra.mxu0 0
        %326 = vmatprep.subr.bf16.mxu0 0
        %327 = vmatpush1.bf16.msra.mxu0 0
        %328 = vmatprep.subr.bf16.mxu0 0
        %329 = vmatpush1.bf16.msra.mxu0 0
        %330 = vmatprep.subr.bf16.mxu0 0
        %331 = vmatpush1.bf16.msra.mxu0 0
        %332 = vmatprep.subr.bf16.mxu0 0
        %333 = vmatpush1.bf16.msra.mxu0 0
        %334 = vmatprep.subr.bf16.mxu0 0
        %335 = vmatpush1.bf16.msra.mxu0 0
        %336 = vmatprep.subr.bf16.mxu0 0
        %337 = vmatpush1.bf16.msra.mxu0 0
        %338 = vmatprep.subr.bf16.mxu0 0
        %339 = vmatpush1.bf16.msra.mxu0 0
        %340 = vmatprep.subr.bf16.mxu0 0
        %341 = vmatpush1.bf16.msra.mxu0 0
        %342 = vmatprep.subr.bf16.mxu0 0
        %343 = vmatpush1.bf16.msra.mxu0 0
        %344 = vmatprep.subr.bf16.mxu0 0
        %345 = vmatpush1.bf16.msra.mxu0 0
        %346 = vmatprep.mubr.bf16.mxu0 0
        %347 = vmatmul.mubr.bf16.gmra.mrb[0].mxu0 %v312
        %v348 = vpop.f32.mrb[0].mxu0
        %v349 = vadd.f32 0.0, %v348
        %v350 = vpop.f32.mrb[0].mxu0
        %v351 = vadd.f32 0.0, %v350
        %v352 = vpop.f32.mrb[0].mxu0
        %v353 = vadd.f32 0.0, %v352
        %v354 = vpop.f32.mrb[0].mxu0
        %v355 = vadd.f32 0.0, %v354
        %356 = vdwg.mxu0
        %v357 = vpack.c.bf16 %v353, %v349
        %v358 = vld [vmem:[%s2] sm:$0xf]
        %v359 = vld [vmem:[%s2 + $0x4] sm:$0xf]
        %v360 = vld [vmem:[%s2 + $0x8] sm:$0xf]
        %v361 = vld [vmem:[%s2 + $0xc] sm:$0xf]
        %v362 = vld [vmem:[%s2 + $0x10] sm:$0xf]
        %v363 = vld [vmem:[%s2 + $0x14] sm:$0xf]
        %v364 = vld [vmem:[%s2 + $0x18] sm:$0xf]
        %v365 = vld [vmem:[%s2 + $0x1c] sm:$0xf]
        %v374 = vunpack.c.l.b16 %v358
        %v375 = vunpack.c.l.b16 %v359
        %v376 = vunpack.c.l.b16 %v360
        %v377 = vunpack.c.l.b16 %v361
        %v378 = vunpack.c.l.b16 %v362
        %v379 = vunpack.c.l.b16 %v363
        %v380 = vunpack.c.l.b16 %v364
        %v381 = vunpack.c.l.b16 %v365
        %v382 = vpack.c.b16 %v375, %v374
        %v383 = vpack.c.b16 %v377, %v376
        %v384 = vpack.c.b16 %v379, %v378
        %v385 = vpack.c.b16 %v381, %v380
        %v387 = vsel %vm310, %v382, 0
        %v390 = vsel %vm310, %v383, 0
        %v393 = vsel %vm310, %v384, 0
        %v396 = vsel %vm310, %v385, 0
        %398 = vmatprep.subr.bf16.mxu0 0
        %399 = vmatpush1.bf16.msra.mxu0 %v357
        %400 = vmatprep.subr.bf16.mxu0 0
        %401 = vmatpush1.bf16.msra.mxu0 0
        %402 = vmatprep.subr.bf16.mxu0 0
        %403 = vmatpush1.bf16.msra.mxu0 0
        %404 = vmatprep.subr.bf16.mxu0 0
        %405 = vmatpush1.bf16.msra.mxu0 0
        %406 = vmatprep.subr.bf16.mxu0 0
        %407 = vmatpush1.bf16.msra.mxu0 0
        %408 = vmatprep.subr.bf16.mxu0 0
        %409 = vmatpush1.bf16.msra.mxu0 0
        %410 = vmatprep.subr.bf16.mxu0 0
        %411 = vmatpush1.bf16.msra.mxu0 0
        %412 = vmatprep.subr.bf16.mxu0 0
        %413 = vmatpush1.bf16.msra.mxu0 0
        %414 = vmatprep.subr.bf16.mxu0 0
        %415 = vmatpush1.bf16.msra.mxu0 0
        %416 = vmatprep.subr.bf16.mxu0 0
        %417 = vmatpush1.bf16.msra.mxu0 0
        %418 = vmatprep.subr.bf16.mxu0 0
        %419 = vmatpush1.bf16.msra.mxu0 0
        %420 = vmatprep.subr.bf16.mxu0 0
        %421 = vmatpush1.bf16.msra.mxu0 0
        %422 = vmatprep.subr.bf16.mxu0 0
        %423 = vmatpush1.bf16.msra.mxu0 0
        %424 = vmatprep.subr.bf16.mxu0 0
        %425 = vmatpush1.bf16.msra.mxu0 0
        %426 = vmatprep.subr.bf16.mxu0 0
        %427 = vmatpush1.bf16.msra.mxu0 0
        %428 = vmatprep.subr.bf16.mxu0 0
        %429 = vmatpush1.bf16.msra.mxu0 0
        %430 = vmatprep.mubr.bf16.mxu0 0
        %431 = vmatmul.mubr.bf16.gmra.mrb[0].mxu0 %v387
        %v432 = vpop.f32.mrb[0].mxu0
        %v433 = vadd.f32 0.0, %v432
        %v434 = vpop.f32.mrb[0].mxu0
        %v435 = vpop.f32.mrb[0].mxu0
        %v436 = vadd.f32 0.0, %v435
        %v437 = vpop.f32.mrb[0].mxu0
        %438 = vmatprep.mubr.bf16.mxu0 0
        %439 = vmatmul.mubr.bf16.gmra.mrb[0].mxu0 %v390
        %v440 = vpop.f32.mrb[0].mxu0
        %v441 = vadd.f32 0.0, %v440
        %v442 = vpop.f32.mrb[0].mxu0
        %v443 = vpop.f32.mrb[0].mxu0
        %v444 = vadd.f32 0.0, %v443
        %v445 = vpop.f32.mrb[0].mxu0
        %446 = vmatprep.mubr.bf16.mxu0 0
        %447 = vmatmul.mubr.bf16.gmra.mrb[0].mxu0 %v393
        %v448 = vpop.f32.mrb[0].mxu0
        %v449 = vadd.f32 0.0, %v448
        %v450 = vpop.f32.mrb[0].mxu0
        %v451 = vpop.f32.mrb[0].mxu0
        %v452 = vadd.f32 0.0, %v451
        %v453 = vpop.f32.mrb[0].mxu0
        %454 = vmatprep.mubr.bf16.mxu0 0
        %455 = vmatmul.mubr.bf16.gmra.mrb[0].mxu0 %v396
        %v456 = vpop.f32.mrb[0].mxu0
        %v457 = vadd.f32 0.0, %v456
        %v458 = vpop.f32.mrb[0].mxu0
        %v459 = vpop.f32.mrb[0].mxu0
        %v460 = vadd.f32 0.0, %v459
        %v461 = vpop.f32.mrb[0].mxu0
        %462 = vdwg.mxu0
        %v463 = vld [vmem:[%s3] sm:$0xf]
        %v464 = vld [vmem:[%s3 + $0x4] sm:$0xf]
        %v465 = vpack.c.bf16 %v436, %v433
        %v466 = vpack.c.bf16 %v444, %v441
        %v467 = vpack.c.bf16 %v452, %v449
        %v468 = vpack.c.bf16 %v460, %v457
        %v471 = vunpack.c.l.b16 %v463
        %v472 = vunpack.c.l.b16 %v464
        %v473 = vpack.c.b16 %v472, %v471
        %vm474 = vcmask 523264
        %v476 = vsel %vm474, %v473, 0
        %478 = vmatprep.subr.bf16.mxu0 0
        %479 = vmatpush1.bf16.msra.mxu0 %v465
        %480 = vmatprep.subr.bf16.mxu0 0
        %481 = vmatpush1.bf16.msra.mxu0 %v466
        %482 = vmatprep.subr.bf16.mxu0 0
        %483 = vmatpush1.bf16.msra.mxu0 %v467
        %484 = vmatprep.subr.bf16.mxu0 0
        %485 = vmatpush1.bf16.msra.mxu0 %v468
        %486 = vmatprep.subr.bf16.mxu0 0
        %487 = vmatpush1.bf16.msra.mxu0 0
        %488 = vmatprep.subr.bf16.mxu0 0
        %489 = vmatpush1.bf16.msra.mxu0 0
        %490 = vmatprep.subr.bf16.mxu0 0
        %491 = vmatpush1.bf16.msra.mxu0 0
        %492 = vmatprep.subr.bf16.mxu0 0
        %493 = vmatpush1.bf16.msra.mxu0 0
        %494 = vmatprep.subr.bf16.mxu0 0
        %495 = vmatpush1.bf16.msra.mxu0 0
        %496 = vmatprep.subr.bf16.mxu0 0
        %497 = vmatpush1.bf16.msra.mxu0 0
        %498 = vmatprep.subr.bf16.mxu0 0
        %499 = vmatpush1.bf16.msra.mxu0 0
        %500 = vmatprep.subr.bf16.mxu0 0
        %501 = vmatpush1.bf16.msra.mxu0 0
        %502 = vmatprep.subr.bf16.mxu0 0
        %503 = vmatpush1.bf16.msra.mxu0 0
        %504 = vmatprep.subr.bf16.mxu0 0
        %505 = vmatpush1.bf16.msra.mxu0 0
        %506 = vmatprep.subr.bf16.mxu0 0
        %507 = vmatpush1.bf16.msra.mxu0 0
        %508 = vmatprep.subr.bf16.mxu0 0
        %509 = vmatpush1.bf16.msra.mxu0 0
        %510 = vmatprep.mubr.bf16.mxu0 0
        %511 = vmatmul.mubr.bf16.gmra.mrb[0].mxu0 %v476
        %v512 = vpop.f32.mrb[0].mxu0
        %v513 = vadd.f32 0.0, %v512
        %v514 = vpop.f32.mrb[0].mxu0
        %v515 = vpop.f32.mrb[0].mxu0
        %v516 = vadd.f32 0.0, %v515
        %v517 = vpop.f32.mrb[0].mxu0
        %518 = vdwg.mxu0
        %v519 = vadd.f32 %v351, %v513
        %v520 = vadd.f32 %v355, %v516
        %s521 = scalar_lea.vmem %s2, 32
        %v522 = vld [vmem:[%s521] sm:$0xf]
        %v523 = vld [vmem:[%s521 + $0x4] sm:$0xf]
        %v524 = vld [vmem:[%s521 + $0x8] sm:$0xf]
        %v525 = vld [vmem:[%s521 + $0xc] sm:$0xf]
        %v526 = vld [vmem:[%s521 + $0x10] sm:$0xf]
        %v527 = vld [vmem:[%s521 + $0x14] sm:$0xf]
        %v528 = vld [vmem:[%s521 + $0x18] sm:$0xf]
        %v529 = vld [vmem:[%s521 + $0x1c] sm:$0xf]
        %v538 = vunpack.c.l.b16 %v522
        %v539 = vunpack.c.l.b16 %v523
        %v540 = vunpack.c.l.b16 %v524
        %v541 = vunpack.c.l.b16 %v525
        %v542 = vunpack.c.l.b16 %v526
        %v543 = vunpack.c.l.b16 %v527
        %v544 = vunpack.c.l.b16 %v528
        %v545 = vunpack.c.l.b16 %v529
        %v546 = vpack.c.b16 %v539, %v538
        %v547 = vpack.c.b16 %v541, %v540
        %v548 = vpack.c.b16 %v543, %v542
        %v549 = vpack.c.b16 %v545, %v544
        %551 = vrot.lane.b32.xlu0 %v357, 96
        %v552 = vpop.permute.xlu0 %551
        %v555 = vsel %vm310, %v546, 0
        %v558 = vsel %vm310, %v547, 0
        %v561 = vsel %vm310, %v548, 0
        %v564 = vsel %vm310, %v549, 0
        %566 = vmatprep.subr.bf16.mxu0 0
        %567 = vmatpush1.bf16.msra.mxu0 %v552
        %568 = vmatprep.subr.bf16.mxu0 0
        %569 = vmatpush1.bf16.msra.mxu0 0
        %570 = vmatprep.subr.bf16.mxu0 0
        %571 = vmatpush1.bf16.msra.mxu0 0
        %572 = vmatprep.subr.bf16.mxu0 0
        %573 = vmatpush1.bf16.msra.mxu0 0
        %574 = vmatprep.subr.bf16.mxu0 0
        %575 = vmatpush1.bf16.msra.mxu0 0
        %576 = vmatprep.subr.bf16.mxu0 0
        %577 = vmatpush1.bf16.msra.mxu0 0
        %578 = vmatprep.subr.bf16.mxu0 0
        %579 = vmatpush1.bf16.msra.mxu0 0
        %580 = vmatprep.subr.bf16.mxu0 0
        %581 = vmatpush1.bf16.msra.mxu0 0
        %582 = vmatprep.subr.bf16.mxu0 0
        %583 = vmatpush1.bf16.msra.mxu0 0
        %584 = vmatprep.subr.bf16.mxu0 0
        %585 = vmatpush1.bf16.msra.mxu0 0
        %586 = vmatprep.subr.bf16.mxu0 0
        %587 = vmatpush1.bf16.msra.mxu0 0
        %588 = vmatprep.subr.bf16.mxu0 0
        %589 = vmatpush1.bf16.msra.mxu0 0
        %590 = vmatprep.subr.bf16.mxu0 0
        %591 = vmatpush1.bf16.msra.mxu0 0
        %592 = vmatprep.subr.bf16.mxu0 0
        %593 = vmatpush1.bf16.msra.mxu0 0
        %594 = vmatprep.subr.bf16.mxu0 0
        %595 = vmatpush1.bf16.msra.mxu0 0
        %596 = vmatprep.subr.bf16.mxu0 0
        %597 = vmatpush1.bf16.msra.mxu0 0
        %598 = vmatprep.mubr.bf16.mxu0 0
        %599 = vmatmul.mubr.bf16.gmra.mrb[0].mxu0 %v555
        %v600 = vpop.f32.mrb[0].mxu0
        %v601 = vadd.f32 0.0, %v600
        %v602 = vpop.f32.mrb[0].mxu0
        %v603 = vpop.f32.mrb[0].mxu0
        %v604 = vadd.f32 0.0, %v603
        %v605 = vpop.f32.mrb[0].mxu0
        %606 = vmatprep.mubr.bf16.mxu0 0
        %607 = vmatmul.mubr.bf16.gmra.mrb[0].mxu0 %v558
        %v608 = vpop.f32.mrb[0].mxu0
        %v609 = vadd.f32 0.0, %v608
        %v610 = vpop.f32.mrb[0].mxu0
        %v611 = vpop.f32.mrb[0].mxu0
        %v612 = vadd.f32 0.0, %v611
        %v613 = vpop.f32.mrb[0].mxu0
        %614 = vmatprep.mubr.bf16.mxu0 0
        %615 = vmatmul.mubr.bf16.gmra.mrb[0].mxu0 %v561
        %v616 = vpop.f32.mrb[0].mxu0
        %v617 = vadd.f32 0.0, %v616
        %v618 = vpop.f32.mrb[0].mxu0
        %v619 = vpop.f32.mrb[0].mxu0
        %v620 = vadd.f32 0.0, %v619
        %v621 = vpop.f32.mrb[0].mxu0
        %622 = vmatprep.mubr.bf16.mxu0 0
        %623 = vmatmul.mubr.bf16.gmra.mrb[0].mxu0 %v564
        %v624 = vpop.f32.mrb[0].mxu0
        %v625 = vadd.f32 0.0, %v624
        %v626 = vpop.f32.mrb[0].mxu0
        %v627 = vpop.f32.mrb[0].mxu0
        %v628 = vadd.f32 0.0, %v627
        %v629 = vpop.f32.mrb[0].mxu0
        %630 = vdwg.mxu0
        %s631 = scalar_lea.vmem %s3, 8
        %v632 = vld [vmem:[%s631] sm:$0xf]
        %v633 = vld [vmem:[%s631 + $0x4] sm:$0xf]
        %v634 = vpack.c.bf16 %v604, %v601
        %v635 = vpack.c.bf16 %v612, %v609
        %v636 = vpack.c.bf16 %v620, %v617
        %v637 = vpack.c.bf16 %v628, %v625
        %v640 = vunpack.c.l.b16 %v632
        %v641 = vunpack.c.l.b16 %v633
        %v642 = vpack.c.b16 %v641, %v640
        %v644 = vsel %vm474, %v642, 0
        %646 = vmatprep.subr.bf16.mxu0 0
        %647 = vmatpush1.bf16.msra.mxu0 %v634
        %648 = vmatprep.subr.bf16.mxu0 0
        %649 = vmatpush1.bf16.msra.mxu0 %v635
        %650 = vmatprep.subr.bf16.mxu0 0
        %651 = vmatpush1.bf16.msra.mxu0 %v636
        %652 = vmatprep.subr.bf16.mxu0 0
        %653 = vmatpush1.bf16.msra.mxu0 %v637
        %654 = vmatprep.subr.bf16.mxu0 0
        %655 = vmatpush1.bf16.msra.mxu0 0
        %656 = vmatprep.subr.bf16.mxu0 0
        %657 = vmatpush1.bf16.msra.mxu0 0
        %658 = vmatprep.subr.bf16.mxu0 0
        %659 = vmatpush1.bf16.msra.mxu0 0
        %660 = vmatprep.subr.bf16.mxu0 0
        %661 = vmatpush1.bf16.msra.mxu0 0
        %662 = vmatprep.subr.bf16.mxu0 0
        %663 = vmatpush1.bf16.msra.mxu0 0
        %664 = vmatprep.subr.bf16.mxu0 0
        %665 = vmatpush1.bf16.msra.mxu0 0
        %666 = vmatprep.subr.bf16.mxu0 0
        %667 = vmatpush1.bf16.msra.mxu0 0
        %668 = vmatprep.subr.bf16.mxu0 0
        %669 = vmatpush1.bf16.msra.mxu0 0
        %670 = vmatprep.subr.bf16.mxu0 0
        %671 = vmatpush1.bf16.msra.mxu0 0
        %672 = vmatprep.subr.bf16.mxu0 0
        %673 = vmatpush1.bf16.msra.mxu0 0
        %674 = vmatprep.subr.bf16.mxu0 0
        %675 = vmatpush1.bf16.msra.mxu0 0
        %676 = vmatprep.subr.bf16.mxu0 0
        %677 = vmatpush1.bf16.msra.mxu0 0
        %678 = vmatprep.mubr.bf16.mxu0 0
        %679 = vmatmul.mubr.bf16.gmra.mrb[0].mxu0 %v644
        %v680 = vpop.f32.mrb[0].mxu0
        %v681 = vadd.f32 0.0, %v680
        %v682 = vpop.f32.mrb[0].mxu0
        %v683 = vpop.f32.mrb[0].mxu0
        %v684 = vadd.f32 0.0, %v683
        %v685 = vpop.f32.mrb[0].mxu0
        %686 = vdwg.mxu0
        %v687 = vadd.f32 %v519, %v681
        %v688 = vadd.f32 %v520, %v684
        %s689 = scalar_lea.vmem %s2, 64
        %v690 = vld [vmem:[%s689] sm:$0xf]
        %v691 = vld [vmem:[%s689 + $0x4] sm:$0xf]
        %v692 = vld [vmem:[%s689 + $0x8] sm:$0xf]
        %v693 = vld [vmem:[%s689 + $0xc] sm:$0xf]
        %v694 = vld [vmem:[%s689 + $0x10] sm:$0xf]
        %v695 = vld [vmem:[%s689 + $0x14] sm:$0xf]
        %v696 = vld [vmem:[%s689 + $0x18] sm:$0xf]
        %v697 = vld [vmem:[%s689 + $0x1c] sm:$0xf]
        %v706 = vunpack.c.l.b16 %v690
        %v707 = vunpack.c.l.b16 %v691
        %v708 = vunpack.c.l.b16 %v692
        %v709 = vunpack.c.l.b16 %v693
        %v710 = vunpack.c.l.b16 %v694
        %v711 = vunpack.c.l.b16 %v695
        %v712 = vunpack.c.l.b16 %v696
        %v713 = vunpack.c.l.b16 %v697
        %v714 = vpack.c.b16 %v707, %v706
        %v715 = vpack.c.b16 %v709, %v708
        %v716 = vpack.c.b16 %v711, %v710
        %v717 = vpack.c.b16 %v713, %v712
        %718 = vrot.lane.b32.xlu0 %v357, 64
        %v719 = vpop.permute.xlu0 %718
        %v722 = vsel %vm310, %v714, 0
        %v725 = vsel %vm310, %v715, 0
        %v728 = vsel %vm310, %v716, 0
        %v731 = vsel %vm310, %v717, 0
        %733 = vmatprep.subr.bf16.mxu0 0
        %734 = vmatpush1.bf16.msra.mxu0 %v719
        %735 = vmatprep.subr.bf16.mxu0 0
        %736 = vmatpush1.bf16.msra.mxu0 0
        %737 = vmatprep.subr.bf16.mxu0 0
        %738 = vmatpush1.bf16.msra.mxu0 0
        %739 = vmatprep.subr.bf16.mxu0 0
        %740 = vmatpush1.bf16.msra.mxu0 0
        %741 = vmatprep.subr.bf16.mxu0 0
        %742 = vmatpush1.bf16.msra.mxu0 0
        %743 = vmatprep.subr.bf16.mxu0 0
        %744 = vmatpush1.bf16.msra.mxu0 0
        %745 = vmatprep.subr.bf16.mxu0 0
        %746 = vmatpush1.bf16.msra.mxu0 0
        %747 = vmatprep.subr.bf16.mxu0 0
        %748 = vmatpush1.bf16.msra.mxu0 0
        %749 = vmatprep.subr.bf16.mxu0 0
        %750 = vmatpush1.bf16.msra.mxu0 0
        %751 = vmatprep.subr.bf16.mxu0 0
        %752 = vmatpush1.bf16.msra.mxu0 0
        %753 = vmatprep.subr.bf16.mxu0 0
        %754 = vmatpush1.bf16.msra.mxu0 0
        %755 = vmatprep.subr.bf16.mxu0 0
        %756 = vmatpush1.bf16.msra.mxu0 0
        %757 = vmatprep.subr.bf16.mxu0 0
        %758 = vmatpush1.bf16.msra.mxu0 0
        %759 = vmatprep.subr.bf16.mxu0 0
        %760 = vmatpush1.bf16.msra.mxu0 0
        %761 = vmatprep.subr.bf16.mxu0 0
        %762 = vmatpush1.bf16.msra.mxu0 0
        %763 = vmatprep.subr.bf16.mxu0 0
        %764 = vmatpush1.bf16.msra.mxu0 0
        %765 = vmatprep.mubr.bf16.mxu0 0
        %766 = vmatmul.mubr.bf16.gmra.mrb[0].mxu0 %v722
        %v767 = vpop.f32.mrb[0].mxu0
        %v768 = vadd.f32 0.0, %v767
        %v769 = vpop.f32.mrb[0].mxu0
        %v770 = vpop.f32.mrb[0].mxu0
        %v771 = vadd.f32 0.0, %v770
        %v772 = vpop.f32.mrb[0].mxu0
        %773 = vmatprep.mubr.bf16.mxu0 0
        %774 = vmatmul.mubr.bf16.gmra.mrb[0].mxu0 %v725
        %v775 = vpop.f32.mrb[0].mxu0
        %v776 = vadd.f32 0.0, %v775
        %v777 = vpop.f32.mrb[0].mxu0
        %v778 = vpop.f32.mrb[0].mxu0
        %v779 = vadd.f32 0.0, %v778
        %v780 = vpop.f32.mrb[0].mxu0
        %781 = vmatprep.mubr.bf16.mxu0 0
        %782 = vmatmul.mubr.bf16.gmra.mrb[0].mxu0 %v728
        %v783 = vpop.f32.mrb[0].mxu0
        %v784 = vadd.f32 0.0, %v783
        %v785 = vpop.f32.mrb[0].mxu0
        %v786 = vpop.f32.mrb[0].mxu0
        %v787 = vadd.f32 0.0, %v786
        %v788 = vpop.f32.mrb[0].mxu0
        %789 = vmatprep.mubr.bf16.mxu0 0
        %790 = vmatmul.mubr.bf16.gmra.mrb[0].mxu0 %v731
        %v791 = vpop.f32.mrb[0].mxu0
        %v792 = vadd.f32 0.0, %v791
        %v793 = vpop.f32.mrb[0].mxu0
        %v794 = vpop.f32.mrb[0].mxu0
        %v795 = vadd.f32 0.0, %v794
        %v796 = vpop.f32.mrb[0].mxu0
        %797 = vdwg.mxu0
        %s798 = scalar_lea.vmem %s3, 16
        %v799 = vld [vmem:[%s798] sm:$0xf]
        %v800 = vld [vmem:[%s798 + $0x4] sm:$0xf]
        %v801 = vpack.c.bf16 %v771, %v768
        %v802 = vpack.c.bf16 %v779, %v776
        %v803 = vpack.c.bf16 %v787, %v784
        %v804 = vpack.c.bf16 %v795, %v792
        %v807 = vunpack.c.l.b16 %v799
        %v808 = vunpack.c.l.b16 %v800
        %v809 = vpack.c.b16 %v808, %v807
        %v811 = vsel %vm474, %v809, 0
        %813 = vmatprep.subr.bf16.mxu0 0
        %814 = vmatpush1.bf16.msra.mxu0 %v801
        %815 = vmatprep.subr.bf16.mxu0 0
        %816 = vmatpush1.bf16.msra.mxu0 %v802
        %817 = vmatprep.subr.bf16.mxu0 0
        %818 = vmatpush1.bf16.msra.mxu0 %v803
        %819 = vmatprep.subr.bf16.mxu0 0
        %820 = vmatpush1.bf16.msra.mxu0 %v804
        %821 = vmatprep.subr.bf16.mxu0 0
        %822 = vmatpush1.bf16.msra.mxu0 0
        %823 = vmatprep.subr.bf16.mxu0 0
        %824 = vmatpush1.bf16.msra.mxu0 0
        %825 = vmatprep.subr.bf16.mxu0 0
        %826 = vmatpush1.bf16.msra.mxu0 0
        %827 = vmatprep.subr.bf16.mxu0 0
        %828 = vmatpush1.bf16.msra.mxu0 0
        %829 = vmatprep.subr.bf16.mxu0 0
        %830 = vmatpush1.bf16.msra.mxu0 0
        %831 = vmatprep.subr.bf16.mxu0 0
        %832 = vmatpush1.bf16.msra.mxu0 0
        %833 = vmatprep.subr.bf16.mxu0 0
        %834 = vmatpush1.bf16.msra.mxu0 0
        %835 = vmatprep.subr.bf16.mxu0 0
        %836 = vmatpush1.bf16.msra.mxu0 0
        %837 = vmatprep.subr.bf16.mxu0 0
        %838 = vmatpush1.bf16.msra.mxu0 0
        %839 = vmatprep.subr.bf16.mxu0 0
        %840 = vmatpush1.bf16.msra.mxu0 0
        %841 = vmatprep.subr.bf16.mxu0 0
        %842 = vmatpush1.bf16.msra.mxu0 0
        %843 = vmatprep.subr.bf16.mxu0 0
        %844 = vmatpush1.bf16.msra.mxu0 0
        %845 = vmatprep.mubr.bf16.mxu0 0
        %846 = vmatmul.mubr.bf16.gmra.mrb[0].mxu0 %v811
        %v847 = vpop.f32.mrb[0].mxu0
        %v848 = vadd.f32 0.0, %v847
        %v849 = vpop.f32.mrb[0].mxu0
        %v850 = vpop.f32.mrb[0].mxu0
        %v851 = vadd.f32 0.0, %v850
        %v852 = vpop.f32.mrb[0].mxu0
        %853 = vdwg.mxu0
        %v854 = vadd.f32 %v687, %v848
        %v855 = vadd.f32 %v688, %v851
        %s856 = scalar_lea.vmem %s2, 96
        %v857 = vld [vmem:[%s856] sm:$0xf]
        %v858 = vld [vmem:[%s856 + $0x4] sm:$0xf]
        %v859 = vld [vmem:[%s856 + $0x8] sm:$0xf]
        %v860 = vld [vmem:[%s856 + $0xc] sm:$0xf]
        %v861 = vld [vmem:[%s856 + $0x10] sm:$0xf]
        %v862 = vld [vmem:[%s856 + $0x14] sm:$0xf]
        %v863 = vld [vmem:[%s856 + $0x18] sm:$0xf]
        %v864 = vld [vmem:[%s856 + $0x1c] sm:$0xf]
        %v873 = vunpack.c.l.b16 %v857
        %v874 = vunpack.c.l.b16 %v858
        %v875 = vunpack.c.l.b16 %v859
        %v876 = vunpack.c.l.b16 %v860
        %v877 = vunpack.c.l.b16 %v861
        %v878 = vunpack.c.l.b16 %v862
        %v879 = vunpack.c.l.b16 %v863
        %v880 = vunpack.c.l.b16 %v864
        %v881 = vpack.c.b16 %v874, %v873
        %v882 = vpack.c.b16 %v876, %v875
        %v883 = vpack.c.b16 %v878, %v877
        %v884 = vpack.c.b16 %v880, %v879
        %885 = vrot.lane.b32.xlu0 %v357, 32
        %v886 = vpop.permute.xlu0 %885
        %v889 = vsel %vm310, %v881, 0
        %v892 = vsel %vm310, %v882, 0
        %v895 = vsel %vm310, %v883, 0
        %v898 = vsel %vm310, %v884, 0
        %900 = vmatprep.subr.bf16.mxu0 0
        %901 = vmatpush1.bf16.msra.mxu0 %v886
        %902 = vmatprep.subr.bf16.mxu0 0
        %903 = vmatpush1.bf16.msra.mxu0 0
        %904 = vmatprep.subr.bf16.mxu0 0
        %905 = vmatpush1.bf16.msra.mxu0 0
        %906 = vmatprep.subr.bf16.mxu0 0
        %907 = vmatpush1.bf16.msra.mxu0 0
        %908 = vmatprep.subr.bf16.mxu0 0
        %909 = vmatpush1.bf16.msra.mxu0 0
        %910 = vmatprep.subr.bf16.mxu0 0
        %911 = vmatpush1.bf16.msra.mxu0 0
        %912 = vmatprep.subr.bf16.mxu0 0
        %913 = vmatpush1.bf16.msra.mxu0 0
        %914 = vmatprep.subr.bf16.mxu0 0
        %915 = vmatpush1.bf16.msra.mxu0 0
        %916 = vmatprep.subr.bf16.mxu0 0
        %917 = vmatpush1.bf16.msra.mxu0 0
        %918 = vmatprep.subr.bf16.mxu0 0
        %919 = vmatpush1.bf16.msra.mxu0 0
        %920 = vmatprep.subr.bf16.mxu0 0
        %921 = vmatpush1.bf16.msra.mxu0 0
        %922 = vmatprep.subr.bf16.mxu0 0
        %923 = vmatpush1.bf16.msra.mxu0 0
        %924 = vmatprep.subr.bf16.mxu0 0
        %925 = vmatpush1.bf16.msra.mxu0 0
        %926 = vmatprep.subr.bf16.mxu0 0
        %927 = vmatpush1.bf16.msra.mxu0 0
        %928 = vmatprep.subr.bf16.mxu0 0
        %929 = vmatpush1.bf16.msra.mxu0 0
        %930 = vmatprep.subr.bf16.mxu0 0
        %931 = vmatpush1.bf16.msra.mxu0 0
        %932 = vmatprep.mubr.bf16.mxu0 0
        %933 = vmatmul.mubr.bf16.gmra.mrb[0].mxu0 %v889
        %v934 = vpop.f32.mrb[0].mxu0
        %v935 = vadd.f32 0.0, %v934
        %v936 = vpop.f32.mrb[0].mxu0
        %v937 = vpop.f32.mrb[0].mxu0
        %v938 = vadd.f32 0.0, %v937
        %v939 = vpop.f32.mrb[0].mxu0
        %940 = vmatprep.mubr.bf16.mxu0 0
        %941 = vmatmul.mubr.bf16.gmra.mrb[0].mxu0 %v892
        %v942 = vpop.f32.mrb[0].mxu0
        %v943 = vadd.f32 0.0, %v942
        %v944 = vpop.f32.mrb[0].mxu0
        %v945 = vpop.f32.mrb[0].mxu0
        %v946 = vadd.f32 0.0, %v945
        %v947 = vpop.f32.mrb[0].mxu0
        %948 = vmatprep.mubr.bf16.mxu0 0
        %949 = vmatmul.mubr.bf16.gmra.mrb[0].mxu0 %v895
        %v950 = vpop.f32.mrb[0].mxu0
        %v951 = vadd.f32 0.0, %v950
        %v952 = vpop.f32.mrb[0].mxu0
        %v953 = vpop.f32.mrb[0].mxu0
        %v954 = vadd.f32 0.0, %v953
        %v955 = vpop.f32.mrb[0].mxu0
        %956 = vmatprep.mubr.bf16.mxu0 0
        %957 = vmatmul.mubr.bf16.gmra.mrb[0].mxu0 %v898
        %v958 = vpop.f32.mrb[0].mxu0
        %v959 = vadd.f32 0.0, %v958
        %v960 = vpop.f32.mrb[0].mxu0
        %v961 = vpop.f32.mrb[0].mxu0
        %v962 = vadd.f32 0.0, %v961
        %v963 = vpop.f32.mrb[0].mxu0
        %964 = vdwg.mxu0
        %s965 = scalar_lea.vmem %s3, 24
        %v966 = vld [vmem:[%s965] sm:$0xf]
        %v967 = vld [vmem:[%s965 + $0x4] sm:$0xf]
        %v968 = vpack.c.bf16 %v938, %v935
        %v969 = vpack.c.bf16 %v946, %v943
        %v970 = vpack.c.bf16 %v954, %v951
        %v971 = vpack.c.bf16 %v962, %v959
        %v974 = vunpack.c.l.b16 %v966
        %v975 = vunpack.c.l.b16 %v967
        %v976 = vpack.c.b16 %v975, %v974
        %v978 = vsel %vm474, %v976, 0
        %980 = vmatprep.subr.bf16.mxu0 0
        %981 = vmatpush1.bf16.msra.mxu0 %v968
        %982 = vmatprep.subr.bf16.mxu0 0
        %983 = vmatpush1.bf16.msra.mxu0 %v969
        %984 = vmatprep.subr.bf16.mxu0 0
        %985 = vmatpush1.bf16.msra.mxu0 %v970
        %986 = vmatprep.subr.bf16.mxu0 0
        %987 = vmatpush1.bf16.msra.mxu0 %v971
        %988 = vmatprep.subr.bf16.mxu0 0
        %989 = vmatpush1.bf16.msra.mxu0 0
        %990 = vmatprep.subr.bf16.mxu0 0
        %991 = vmatpush1.bf16.msra.mxu0 0
        %992 = vmatprep.subr.bf16.mxu0 0
        %993 = vmatpush1.bf16.msra.mxu0 0
        %994 = vmatprep.subr.bf16.mxu0 0
        %995 = vmatpush1.bf16.msra.mxu0 0
        %996 = vmatprep.subr.bf16.mxu0 0
        %997 = vmatpush1.bf16.msra.mxu0 0
        %998 = vmatprep.subr.bf16.mxu0 0
        %999 = vmatpush1.bf16.msra.mxu0 0
        %1000 = vmatprep.subr.bf16.mxu0 0
        %1001 = vmatpush1.bf16.msra.mxu0 0
        %1002 = vmatprep.subr.bf16.mxu0 0
        %1003 = vmatpush1.bf16.msra.mxu0 0
        %1004 = vmatprep.subr.bf16.mxu0 0
        %1005 = vmatpush1.bf16.msra.mxu0 0
        %1006 = vmatprep.subr.bf16.mxu0 0
        %1007 = vmatpush1.bf16.msra.mxu0 0
        %1008 = vmatprep.subr.bf16.mxu0 0
        %1009 = vmatpush1.bf16.msra.mxu0 0
        %1010 = vmatprep.subr.bf16.mxu0 0
        %1011 = vmatpush1.bf16.msra.mxu0 0
        %1012 = vmatprep.mubr.bf16.mxu0 0
        %1013 = vmatmul.mubr.bf16.gmra.mrb[0].mxu0 %v978
        %v1014 = vpop.f32.mrb[0].mxu0
        %v1015 = vadd.f32 0.0, %v1014
        %v1016 = vpop.f32.mrb[0].mxu0
        %v1017 = vpop.f32.mrb[0].mxu0
        %v1018 = vadd.f32 0.0, %v1017
        %v1019 = vpop.f32.mrb[0].mxu0
        %1020 = vdwg.mxu0
        %v1021 = vadd.f32 %v854, %v1015
        %v1022 = vadd.f32 %v855, %v1018
        %v1023 = vld [vmem:[%s5] sm:$0x1]
        %v1025 = vlaneseq
        %v1026 = vshrl.u32 %v1025, 7
        %v1027 = vsub.s32 0, %v1026
        %v1028 = vrot.slane %v1023, %v1027
        %v1030 = vadd.f32 %v1021, %v1028
        %v1031 = vadd.f32 %v1022, %v1028
        %v1032 = vmax.f32 %v1030, 0.0
        %v1033 = vmax.f32 %v1031, 0.0
        %v1034 = vpack.c.bf16 %v1033, %v1032
        %v1036 = vunpack.c.l.b16 %v1034
        %v1037 = vunpack.c.h.b16 %v1034
        %v1038 = vpack.c.b16 %v1036, %v1036
        %v1039 = vpack.c.b16 %v1037, %v1037
        %vm1042 = vcmask 257024
        %1043 = vst.msk [vmem:[%s272] sm:$0xf] %vm1042, %v1038
        %1044 = vst.msk [vmem:[%s272 + $0x4] sm:$0xf] %vm1042, %v1039
        %v1045 = vld [vmem:[%s4] sm:$0xf]
        %v1046 = vld [vmem:[%s4 + $0x4] sm:$0xf]
        %v1047 = vld [vmem:[%s4 + $0x8] sm:$0xf]
        %v1048 = vld [vmem:[%s4 + $0xc] sm:$0xf]
        %v1049 = vld [vmem:[%s4 + $0x10] sm:$0xf]
        %v1050 = vld [vmem:[%s4 + $0x14] sm:$0xf]
        %v1051 = vld [vmem:[%s4 + $0x18] sm:$0xf]
        %v1052 = vld [vmem:[%s4 + $0x1c] sm:$0xf]
        %v1053 = vld [vmem:[%s4 + $0x20] sm:$0xf]
        %v1054 = vld [vmem:[%s4 + $0x24] sm:$0xf]
        %v1055 = vld [vmem:[%s4 + $0x28] sm:$0xf]
        %v1056 = vld [vmem:[%s4 + $0x2c] sm:$0xf]
        %v1057 = vld [vmem:[%s4 + $0x30] sm:$0xf]
        %v1058 = vld [vmem:[%s4 + $0x34] sm:$0xf]
        %v1059 = vld [vmem:[%s4 + $0x38] sm:$0xf]
        %v1060 = vld [vmem:[%s4 + $0x3c] sm:$0xf]
        %v1061 = vld [vmem:[%s4 + $0x40] sm:$0xf]
        %v1062 = vld [vmem:[%s4 + $0x44] sm:$0xf]
        %v1063 = vld [vmem:[%s4 + $0x48] sm:$0xf]
        %v1064 = vld [vmem:[%s4 + $0x4c] sm:$0xf]
        %v1065 = vld [vmem:[%s4 + $0x50] sm:$0xf]
        %v1066 = vld [vmem:[%s4 + $0x54] sm:$0xf]
        %v1067 = vld [vmem:[%s4 + $0x58] sm:$0xf]
        %v1068 = vld [vmem:[%s4 + $0x5c] sm:$0xf]
        %v1069 = vld [vmem:[%s4 + $0x60] sm:$0xf]
        %v1070 = vld [vmem:[%s4 + $0x64] sm:$0xf]
        %v1071 = vld [vmem:[%s4 + $0x68] sm:$0xf]
        %v1072 = vld [vmem:[%s4 + $0x6c] sm:$0xf]
        %v1073 = vld [vmem:[%s4 + $0x70] sm:$0xf]
        %v1074 = vld [vmem:[%s4 + $0x74] sm:$0xf]
        %v1075 = vld [vmem:[%s4 + $0x78] sm:$0xf]
        %v1076 = vld [vmem:[%s4 + $0x7c] sm:$0xf]
        %v1109 = vunpack.c.l.b16 %v1045
        %v1110 = vunpack.c.l.b16 %v1046
        %v1111 = vunpack.c.l.b16 %v1047
        %v1112 = vunpack.c.l.b16 %v1048
        %v1113 = vunpack.c.l.b16 %v1049
        %v1114 = vunpack.c.l.b16 %v1050
        %v1115 = vunpack.c.l.b16 %v1051
        %v1116 = vunpack.c.l.b16 %v1052
        %v1117 = vunpack.c.l.b16 %v1053
        %v1118 = vunpack.c.l.b16 %v1054
        %v1119 = vunpack.c.l.b16 %v1055
        %v1120 = vunpack.c.l.b16 %v1056
        %v1121 = vunpack.c.l.b16 %v1057
        %v1122 = vunpack.c.l.b16 %v1058
        %v1123 = vunpack.c.l.b16 %v1059
        %v1124 = vunpack.c.l.b16 %v1060
        %v1125 = vunpack.c.l.b16 %v1061
        %v1126 = vunpack.c.l.b16 %v1062
        %v1127 = vunpack.c.l.b16 %v1063
        %v1128 = vunpack.c.l.b16 %v1064
        %v1129 = vunpack.c.l.b16 %v1065
        %v1130 = vunpack.c.l.b16 %v1066
        %v1131 = vunpack.c.l.b16 %v1067
        %v1132 = vunpack.c.l.b16 %v1068
        %v1133 = vunpack.c.l.b16 %v1069
        %v1134 = vunpack.c.l.b16 %v1070
        %v1135 = vunpack.c.l.b16 %v1071
        %v1136 = vunpack.c.l.b16 %v1072
        %v1137 = vunpack.c.l.b16 %v1073
        %v1138 = vunpack.c.l.b16 %v1074
        %v1139 = vunpack.c.l.b16 %v1075
        %v1140 = vunpack.c.l.b16 %v1076
        %v1141 = vpack.c.b16 %v1110, %v1109
        %v1142 = vpack.c.b16 %v1112, %v1111
        %v1143 = vpack.c.b16 %v1114, %v1113
        %v1144 = vpack.c.b16 %v1116, %v1115
        %v1145 = vpack.c.b16 %v1118, %v1117
        %v1146 = vpack.c.b16 %v1120, %v1119
        %v1147 = vpack.c.b16 %v1122, %v1121
        %v1148 = vpack.c.b16 %v1124, %v1123
        %v1149 = vpack.c.b16 %v1126, %v1125
        %v1150 = vpack.c.b16 %v1128, %v1127
        %v1151 = vpack.c.b16 %v1130, %v1129
        %v1152 = vpack.c.b16 %v1132, %v1131
        %v1153 = vpack.c.b16 %v1134, %v1133
        %v1154 = vpack.c.b16 %v1136, %v1135
        %v1155 = vpack.c.b16 %v1138, %v1137
        %v1156 = vpack.c.b16 %v1140, %v1139
        %v1158 = vsel %vm310, %v1141, 0
        %v1161 = vsel %vm310, %v1142, 0
        %v1164 = vsel %vm310, %v1143, 0
        %v1167 = vsel %vm310, %v1144, 0
        %v1170 = vsel %vm310, %v1145, 0
        %v1173 = vsel %vm310, %v1146, 0
        %v1176 = vsel %vm310, %v1147, 0
        %v1179 = vsel %vm310, %v1148, 0
        %v1182 = vsel %vm310, %v1149, 0
        %v1185 = vsel %vm310, %v1150, 0
        %v1188 = vsel %vm310, %v1151, 0
        %v1191 = vsel %vm310, %v1152, 0
        %v1194 = vsel %vm310, %v1153, 0
        %v1197 = vsel %vm310, %v1154, 0
        %v1200 = vsel %vm310, %v1155, 0
        %v1203 = vsel %vm310, %v1156, 0
        %1205 = vmatprep.subr.bf16.mxu0 0
        %1206 = vmatpush1.bf16.msra.mxu0 %v1034
        %1207 = vmatprep.subr.bf16.mxu0 0
        %1208 = vmatpush1.bf16.msra.mxu0 0
        %1209 = vmatprep.subr.bf16.mxu0 0
        %1210 = vmatpush1.bf16.msra.mxu0 0
        %1211 = vmatprep.subr.bf16.mxu0 0
        %1212 = vmatpush1.bf16.msra.mxu0 0
        %1213 = vmatprep.subr.bf16.mxu0 0
        %1214 = vmatpush1.bf16.msra.mxu0 0
        %1215 = vmatprep.subr.bf16.mxu0 0
        %1216 = vmatpush1.bf16.msra.mxu0 0
        %1217 = vmatprep.subr.bf16.mxu0 0
        %1218 = vmatpush1.bf16.msra.mxu0 0
        %1219 = vmatprep.subr.bf16.mxu0 0
        %1220 = vmatpush1.bf16.msra.mxu0 0
        %1221 = vmatprep.subr.bf16.mxu0 0
        %1222 = vmatpush1.bf16.msra.mxu0 0
        %1223 = vmatprep.subr.bf16.mxu0 0
        %1224 = vmatpush1.bf16.msra.mxu0 0
        %1225 = vmatprep.subr.bf16.mxu0 0
        %1226 = vmatpush1.bf16.msra.mxu0 0
        %1227 = vmatprep.subr.bf16.mxu0 0
        %1228 = vmatpush1.bf16.msra.mxu0 0
        %1229 = vmatprep.subr.bf16.mxu0 0
        %1230 = vmatpush1.bf16.msra.mxu0 0
        %1231 = vmatprep.subr.bf16.mxu0 0
        %1232 = vmatpush1.bf16.msra.mxu0 0
        %1233 = vmatprep.subr.bf16.mxu0 0
        %1234 = vmatpush1.bf16.msra.mxu0 0
        %1235 = vmatprep.subr.bf16.mxu0 0
        %1236 = vmatpush1.bf16.msra.mxu0 0
        %1237 = vmatprep.mubr.bf16.mxu0 0
        %1238 = vmatmul.mubr.bf16.gmra.mrb[0].mxu0 %v1158
        %v1239 = vpop.f32.mrb[0].mxu0
        %v1240 = vadd.f32 0.0, %v1239
        %v1241 = vpop.f32.mrb[0].mxu0
        %v1242 = vpop.f32.mrb[0].mxu0
        %v1243 = vadd.f32 0.0, %v1242
        %v1244 = vpop.f32.mrb[0].mxu0
        %1245 = vmatprep.mubr.bf16.mxu0 0
        %1246 = vmatmul.mubr.bf16.gmra.mrb[0].mxu0 %v1161
        %v1247 = vpop.f32.mrb[0].mxu0
        %v1248 = vadd.f32 0.0, %v1247
        %v1249 = vpop.f32.mrb[0].mxu0
        %v1250 = vpop.f32.mrb[0].mxu0
        %v1251 = vadd.f32 0.0, %v1250
        %v1252 = vpop.f32.mrb[0].mxu0
        %1253 = vmatprep.mubr.bf16.mxu0 0
        %1254 = vmatmul.mubr.bf16.gmra.mrb[0].mxu0 %v1164
        %v1255 = vpop.f32.mrb[0].mxu0
        %v1256 = vadd.f32 0.0, %v1255
        %v1257 = vpop.f32.mrb[0].mxu0
        %v1258 = vpop.f32.mrb[0].mxu0
        %v1259 = vadd.f32 0.0, %v1258
        %v1260 = vpop.f32.mrb[0].mxu0
        %1261 = vmatprep.mubr.bf16.mxu0 0
        %1262 = vmatmul.mubr.bf16.gmra.mrb[0].mxu0 %v1167
        %v1263 = vpop.f32.mrb[0].mxu0
        %v1264 = vadd.f32 0.0, %v1263
        %v1265 = vpop.f32.mrb[0].mxu0
        %v1266 = vpop.f32.mrb[0].mxu0
        %v1267 = vadd.f32 0.0, %v1266
        %v1268 = vpop.f32.mrb[0].mxu0
        %1269 = vmatprep.mubr.bf16.mxu0 0
        %1270 = vmatmul.mubr.bf16.gmra.mrb[0].mxu0 %v1170
        %v1271 = vpop.f32.mrb[0].mxu0
        %v1272 = vadd.f32 0.0, %v1271
        %v1273 = vpop.f32.mrb[0].mxu0
        %v1274 = vpop.f32.mrb[0].mxu0
        %v1275 = vadd.f32 0.0, %v1274
        %v1276 = vpop.f32.mrb[0].mxu0
        %1277 = vmatprep.mubr.bf16.mxu0 0
        %1278 = vmatmul.mubr.bf16.gmra.mrb[0].mxu0 %v1173
        %v1279 = vpop.f32.mrb[0].mxu0
        %v1280 = vadd.f32 0.0, %v1279
        %v1281 = vpop.f32.mrb[0].mxu0
        %v1282 = vpop.f32.mrb[0].mxu0
        %v1283 = vadd.f32 0.0, %v1282
        %v1284 = vpop.f32.mrb[0].mxu0
        %1285 = vmatprep.mubr.bf16.mxu0 0
        %1286 = vmatmul.mubr.bf16.gmra.mrb[0].mxu0 %v1176
        %v1287 = vpop.f32.mrb[0].mxu0
        %v1288 = vadd.f32 0.0, %v1287
        %v1289 = vpop.f32.mrb[0].mxu0
        %v1290 = vpop.f32.mrb[0].mxu0
        %v1291 = vadd.f32 0.0, %v1290
        %v1292 = vpop.f32.mrb[0].mxu0
        %1293 = vmatprep.mubr.bf16.mxu0 0
        %1294 = vmatmul.mubr.bf16.gmra.mrb[0].mxu0 %v1179
        %v1295 = vpop.f32.mrb[0].mxu0
        %v1296 = vadd.f32 0.0, %v1295
        %v1297 = vpop.f32.mrb[0].mxu0
        %v1298 = vpop.f32.mrb[0].mxu0
        %v1299 = vadd.f32 0.0, %v1298
        %v1300 = vpop.f32.mrb[0].mxu0
        %1301 = vmatprep.mubr.bf16.mxu0 0
        %1302 = vmatmul.mubr.bf16.gmra.mrb[0].mxu0 %v1182
        %v1303 = vpop.f32.mrb[0].mxu0
        %v1304 = vadd.f32 0.0, %v1303
        %v1305 = vpop.f32.mrb[0].mxu0
        %v1306 = vpop.f32.mrb[0].mxu0
        %v1307 = vadd.f32 0.0, %v1306
        %v1308 = vpop.f32.mrb[0].mxu0
        %1309 = vmatprep.mubr.bf16.mxu0 0
        %1310 = vmatmul.mubr.bf16.gmra.mrb[0].mxu0 %v1185
        %v1311 = vpop.f32.mrb[0].mxu0
        %v1312 = vadd.f32 0.0, %v1311
        %v1313 = vpop.f32.mrb[0].mxu0
        %v1314 = vpop.f32.mrb[0].mxu0
        %v1315 = vadd.f32 0.0, %v1314
        %v1316 = vpop.f32.mrb[0].mxu0
        %1317 = vmatprep.mubr.bf16.mxu0 0
        %1318 = vmatmul.mubr.bf16.gmra.mrb[0].mxu0 %v1188
        %v1319 = vpop.f32.mrb[0].mxu0
        %v1320 = vadd.f32 0.0, %v1319
        %v1321 = vpop.f32.mrb[0].mxu0
        %v1322 = vpop.f32.mrb[0].mxu0
        %v1323 = vadd.f32 0.0, %v1322
        %v1324 = vpop.f32.mrb[0].mxu0
        %1325 = vmatprep.mubr.bf16.mxu0 0
        %1326 = vmatmul.mubr.bf16.gmra.mrb[0].mxu0 %v1191
        %v1327 = vpop.f32.mrb[0].mxu0
        %v1328 = vadd.f32 0.0, %v1327
        %v1329 = vpop.f32.mrb[0].mxu0
        %v1330 = vpop.f32.mrb[0].mxu0
        %v1331 = vadd.f32 0.0, %v1330
        %v1332 = vpop.f32.mrb[0].mxu0
        %1333 = vmatprep.mubr.bf16.mxu0 0
        %1334 = vmatmul.mubr.bf16.gmra.mrb[0].mxu0 %v1194
        %v1335 = vpop.f32.mrb[0].mxu0
        %v1336 = vadd.f32 0.0, %v1335
        %v1337 = vpop.f32.mrb[0].mxu0
        %v1338 = vpop.f32.mrb[0].mxu0
        %v1339 = vadd.f32 0.0, %v1338
        %v1340 = vpop.f32.mrb[0].mxu0
        %1341 = vmatprep.mubr.bf16.mxu0 0
        %1342 = vmatmul.mubr.bf16.gmra.mrb[0].mxu0 %v1197
        %v1343 = vpop.f32.mrb[0].mxu0
        %v1344 = vadd.f32 0.0, %v1343
        %v1345 = vpop.f32.mrb[0].mxu0
        %v1346 = vpop.f32.mrb[0].mxu0
        %v1347 = vadd.f32 0.0, %v1346
        %v1348 = vpop.f32.mrb[0].mxu0
        %1349 = vmatprep.mubr.bf16.mxu0 0
        %1350 = vmatmul.mubr.bf16.gmra.mrb[0].mxu0 %v1200
        %v1351 = vpop.f32.mrb[0].mxu0
        %v1352 = vadd.f32 0.0, %v1351
        %v1353 = vpop.f32.mrb[0].mxu0
        %v1354 = vpop.f32.mrb[0].mxu0
        %v1355 = vadd.f32 0.0, %v1354
        %v1356 = vpop.f32.mrb[0].mxu0
        %1357 = vmatprep.mubr.bf16.mxu0 0
        %1358 = vmatmul.mubr.bf16.gmra.mrb[0].mxu0 %v1203
        %v1359 = vpop.f32.mrb[0].mxu0
        %v1360 = vadd.f32 0.0, %v1359
        %v1361 = vpop.f32.mrb[0].mxu0
        %v1362 = vpop.f32.mrb[0].mxu0
        %v1363 = vadd.f32 0.0, %v1362
        %v1364 = vpop.f32.mrb[0].mxu0
        %1365 = vdwg.mxu0
        %vm1366 = vcmask 261120
        %1367 = vst.msk [vmem:[%s289] sm:$0xff] %vm1366, %v1240
        %1368 = vst.msk [vmem:[%s289 + $0x8] sm:$0xff] %vm1366, %v1243
        %1369 = vst.msk [vmem:[%s289 + $0x10] sm:$0xff] %vm1366, %v1248
        %1370 = vst.msk [vmem:[%s289 + $0x18] sm:$0xff] %vm1366, %v1251
        %1371 = vst.msk [vmem:[%s289 + $0x20] sm:$0xff] %vm1366, %v1256
        %1372 = vst.msk [vmem:[%s289 + $0x28] sm:$0xff] %vm1366, %v1259
        %1373 = vst.msk [vmem:[%s289 + $0x30] sm:$0xff] %vm1366, %v1264
        %1374 = vst.msk [vmem:[%s289 + $0x38] sm:$0xff] %vm1366, %v1267
        %1375 = vst.msk [vmem:[%s289 + $0x40] sm:$0xff] %vm1366, %v1272
        %1376 = vst.msk [vmem:[%s289 + $0x48] sm:$0xff] %vm1366, %v1275
        %1377 = vst.msk [vmem:[%s289 + $0x50] sm:$0xff] %vm1366, %v1280
        %1378 = vst.msk [vmem:[%s289 + $0x58] sm:$0xff] %vm1366, %v1283
        %1379 = vst.msk [vmem:[%s289 + $0x60] sm:$0xff] %vm1366, %v1288
        %1380 = vst.msk [vmem:[%s289 + $0x68] sm:$0xff] %vm1366, %v1291
        %1381 = vst.msk [vmem:[%s289 + $0x70] sm:$0xff] %vm1366, %v1296
        %1382 = vst.msk [vmem:[%s289 + $0x78] sm:$0xff] %vm1366, %v1299
        %1383 = vst.msk [vmem:[%s289 + $0x80] sm:$0xff] %vm1366, %v1304
        %1384 = vst.msk [vmem:[%s289 + $0x88] sm:$0xff] %vm1366, %v1307
        %1385 = vst.msk [vmem:[%s289 + $0x90] sm:$0xff] %vm1366, %v1312
        %1386 = vst.msk [vmem:[%s289 + $0x98] sm:$0xff] %vm1366, %v1315
        %1387 = vst.msk [vmem:[%s289 + $0xa0] sm:$0xff] %vm1366, %v1320
        %1388 = vst.msk [vmem:[%s289 + $0xa8] sm:$0xff] %vm1366, %v1323
        %1389 = vst.msk [vmem:[%s289 + $0xb0] sm:$0xff] %vm1366, %v1328
        %1390 = vst.msk [vmem:[%s289 + $0xb8] sm:$0xff] %vm1366, %v1331
        %1391 = vst.msk [vmem:[%s289 + $0xc0] sm:$0xff] %vm1366, %v1336
        %1392 = vst.msk [vmem:[%s289 + $0xc8] sm:$0xff] %vm1366, %v1339
        %1393 = vst.msk [vmem:[%s289 + $0xd0] sm:$0xff] %vm1366, %v1344
        %1394 = vst.msk [vmem:[%s289 + $0xd8] sm:$0xff] %vm1366, %v1347
        %1395 = vst.msk [vmem:[%s289 + $0xe0] sm:$0xff] %vm1366, %v1352
        %1396 = vst.msk [vmem:[%s289 + $0xe8] sm:$0xff] %vm1366, %v1355
        %1397 = vst.msk [vmem:[%s289 + $0xf0] sm:$0xff] %vm1366, %v1360
        %1398 = vst.msk [vmem:[%s289 + $0xf8] sm:$0xff] %vm1366, %v1363
        %s1399 = sand.u32 %s161, 1
        %s1400 = scalar_lea.sflag [#allocation3], %s1399
        %s1401 = sand.u32 %s161, 1
        %s1402 = smul.addr %s1401, 8
        %s1403 = scalar_lea.vmem [#allocation2], %s1402
        %p1404 = scmp.lt.s32.totalorder %s22, 1
        %s1405 = scalar_select %p1404, %s22, 1
        %s1406 = smul.addr %s1405, 32
        %s1407 = smul.addr %s1406, 8
        %s1408 = scalar_lea.vmem %s7, %s1407
        // Predicated region
        $region45: #{tpu_custom_call.1} parent=43 // pred_check
          %p1409 = pneg %p171
        $region46: #{tpu_custom_call.1} parent=43 // pred_check_branch
          %1411 = sbr.rel (%p1409) target = $region48
        $region47: #{tpu_custom_call.1} parent=43 // pred_region
          %s1413 = ssub.s32 128, 128
          %1414 = vsyncadd %s1400, %s1413
          %s1415 = smul.addr %s22, 2
          %s1416 = smul.addr %s1415, 64
          %s1417 = scalar_lea.hbm %s6, %s1416
          %s1418 = sshll.u32 %s1403, 4
          %s1419 = int_to_ptr.vmem [resolvable:$true] %s1418
          %1424 = dma.vmem_to_hbm [thread:$0]  %s1419, 128, %s1417, %s1400, 64, 64, 4
        $region48: #{tpu_custom_call.1} parent=43 // pred_fallthru
          _
        // Predicated region
        $region49: #{tpu_custom_call.1} parent=43 // pred_check
          %p1425 = pneg %p197
        $region50: #{tpu_custom_call.1} parent=43 // pred_check_branch
          %1427 = sbr.rel (%p1425) target = $region52
        $region51: #{tpu_custom_call.1} parent=43 // pred_region
          _
        $region52: #{tpu_custom_call.1} parent=43 // pred_fallthru
          _
      $region44: #{tpu_custom_call.1} parent=5 // pred_fallthru
        _
      %p1428 = scmp.le.s32.totalorder 2, %s17
      // Predicated region
      $region53: #{tpu_custom_call.1} parent=5 // pred_check
        %p1429 = pneg %p1428
      $region54: #{tpu_custom_call.1} parent=5 // pred_check_branch
        %1431 = sbr.rel (%p1429) target = $region56
      $region55: #{tpu_custom_call.1} parent=5 // pred_region
        %s1432 = ssub.s32 %s17, 2
        // Predicated region
        $region57: #{tpu_custom_call.1} parent=55 // pred_check
          %p1433 = pneg %p177
        $region58: #{tpu_custom_call.1} parent=55 // pred_check_branch
          %1435 = sbr.rel (%p1433) target = $region60
        $region59: #{tpu_custom_call.1} parent=55 // pred_region
          %s1436 = sand.u32 %s162, 1
          %s1437 = scalar_lea.sflag [#allocation3], %s1436
          %s1438 = sand.u32 %s162, 1
          %s1439 = smul.addr %s1438, 8
          %s1440 = scalar_lea.vmem [#allocation2], %s1439
          %1441 = dma.done %s1437, 128
        $region60: #{tpu_custom_call.1} parent=55 // pred_fallthru
          _
        // Predicated region
        $region61: #{tpu_custom_call.1} parent=55 // pred_check
          %p1442 = pneg %p203
        $region62: #{tpu_custom_call.1} parent=55 // pred_check_branch
          %1444 = sbr.rel (%p1442) target = $region64
        $region63: #{tpu_custom_call.1} parent=55 // pred_region
          %p1445 = scmp.lt.s32.totalorder %s23, 1
          %s1446 = scalar_select %p1445, %s23, 1
          %s1447 = smul.addr %s1446, 32
          %s1448 = smul.addr %s1447, 8
          %s1449 = scalar_lea.vmem %s7, %s1448
        $region64: #{tpu_custom_call.1} parent=55 // pred_fallthru
          _
      $region56: #{tpu_custom_call.1} parent=5 // pred_fallthru
        _
    $region6: #{tpu_custom_call.1} parent=1 // loop_footer
      %s21 = sadd.s32 1, %s17
    $region7: #{tpu_custom_call.1} parent=1 // loop_footer_branch
      %16 = sbr.rel target = $region3
    $region8: #{tpu_custom_call.1} parent=1 // loop_exit
      _
    %1450 = vsyncpa [#allocation3], 1
    %s1451 = scalar_lea.sflag [#allocation3], 1
    %1452 = vsyncpa %s1451, 1

</llo_original>
